<compile_context>
chip_gen: v6e
topology: v6e:2x2x1
jax: 0.10.0
libtpu: 0.0.40
codegen_flags: <defaults>
</compile_context>

<pallas_src>
import math

import numpy as np
import jax
import jax.numpy as jnp
from jax.experimental import pallas as pl
from jax.experimental.pallas import tpu as pltpu

# --- small config consistent with the module (hidden divisible by heads) -----
HIDDEN = 32
HEADS = 4
HEAD_DIM = HIDDEN // HEADS
FFN = HIDDEN * 4
LAYERS = 2
BATCH = 2
SEQ = 8
LN_EPS = 1e-5

WIDE = HEADS * HIDDEN        # 128: one vreg lane width, all-heads layout
NGRP = HEADS * HEADS         # 16: all (i, j) head-pair score lanes

_INV_SQRT_HD = 1.0 / math.sqrt(HEAD_DIM)
_INV_SQRT2 = 1.0 / math.sqrt(2.0)


# ----------------------------- kernel helpers ---------------------------------
def _ln(h, gamma, beta):
    mu = jnp.mean(h, axis=-1, keepdims=True)
    var = jnp.mean((h - mu) ** 2, axis=-1, keepdims=True)
    return (h - mu) * jax.lax.rsqrt(var + LN_EPS) * gamma + beta


# ----------------------------- constant matrices -------------------------------
def _selector_mats():
    """Spread / reduce constants for the all-heads attention formulation.

    Wide lane index L = i*HIDDEN + j*HEAD_DIM + d  (i = query head, j = key head).
    """
    H, nh, hd, W, G = HIDDEN, HEADS, HEAD_DIM, WIDE, NGRP
    SQ = np.zeros((H, W), np.float32)   # q[i*hd+d]    -> lane L (all j)
    SK = np.zeros((H, W), np.float32)   # k/v[j*hd+d]  -> lane L (all i)
    CS = np.zeros((W, G), np.float32)   # sum over d per (i,j), scale folded in
    GS = np.zeros((G, G), np.float32)   # per-i group sums (softmax denominator)
    AS = np.zeros((G, W), np.float32)   # attn[i,j]    -> lane L (all d)
    F = np.zeros((W, H), np.float32)    # sum over j   -> out_heads[i*hd+d]
    for i in range(nh):
        for j in range(nh):
            for d in range(hd):
                L = i * H + j * hd + d
                SQ[i * hd + d, L] = 1.0
                SK[j * hd + d, L] = 1.0
                CS[L, i * nh + j] = _INV_SQRT_HD
                AS[i * nh + j, L] = 1.0
                F[L, i * hd + d] = 1.0
    for i in range(nh):
        for j in range(nh):
            for jp in range(nh):
                GS[i * nh + j, i * nh + jp] = 1.0
    return SQ, SK, CS, GS, AS, F


def _perm_mat(B, S):
    """Row permutation reproducing torch's out.transpose(1,2).contiguous().view(B,S,H)
    acting on the head-row-stacked (HEADS*R, HEAD_DIM) layout."""
    H, nh, hd = HIDDEN, HEADS, HEAD_DIM
    R = B * S
    P = np.zeros((nh * R, nh * R), np.float32)
    for b in range(B):
        for i in range(nh):
            for s in range(S):
                flat = i * S * hd + s * hd          # flat offset of (i, s, d=0)
                r = flat // H                       # destination sequence row
                u = (flat % H) // hd                # destination lane block
                P[u * R + b * S + r, i * R + b * S + s] = 1.0
    return P


# ----------------------------- operand packing ----------------------------------
def _blob_layout(B, S, n_layers):
    """Static row offsets of every tensor inside the single packed (rows,128) blob."""
    R = B * S
    off, cur = {}, 0

    def take(name, rows):
        nonlocal cur
        off[name] = cur
        cur += rows

    # multi-row matrices first (all row counts are multiples of 8 -> aligned)
    take("CS", WIDE); take("GS", NGRP); take("AS", NGRP); take("F", WIDE)
    take("PERM", HEADS * R)
    for l in range(n_layers):
        take(f"WQ{l}", HIDDEN); take(f"WK{l}", HIDDEN); take(f"WV{l}", HIDDEN)
        take(f"W1{l}", HIDDEN); take(f"W2{l}", FFN)
    # single-row vectors at the end
    for l in range(n_layers):
        for nm in ("BQ", "BK", "BV", "B1", "G1", "BE1", "B2", "G2", "BE2"):
            take(f"{nm}{l}", 1)
    take("WO", 1); take("BO", 1)
    total = ((cur + 7) // 8) * 8
    return off, total


def pack_operands(params, B, S):
    """Fold the head-spread matrices into the Q/K/V weights and pack every
    parameter + constant into one contiguous (rows, 128) f32 blob."""
    n_layers = int(params["wqkv"].shape[0])
    off, total = _blob_layout(B, S, n_layers)
    SQ, SK, CS, GS, AS, F = _selector_mats()
    PERM = _perm_mat(B, S)
    H = HIDDEN
    blob = np.zeros((total, WIDE), np.float32)

    def put(name, arr):
        arr = np.asarray(arr, np.float32)
        if arr.ndim == 1:
            arr = arr[None, :]
        r0 = off[name]
        blob[r0:r0 + arr.shape[0], :arr.shape[1]] = arr

    put("CS", CS); put("GS", GS); put("AS", AS); put("F", F); put("PERM", PERM)
    for l in range(n_layers):
        wqkv = np.asarray(params["wqkv"][l])
        bqkv = np.asarray(params["bqkv"][l])
        put(f"WQ{l}", wqkv[:, 0:H] @ SQ)           # (32,128) spread-folded
        put(f"WK{l}", wqkv[:, H:2 * H] @ SK)
        put(f"WV{l}", wqkv[:, 2 * H:3 * H] @ SK)
        put(f"BQ{l}", bqkv[:, 0:H] @ SQ)
        put(f"BK{l}", bqkv[:, H:2 * H] @ SK)
        put(f"BV{l}", bqkv[:, 2 * H:3 * H] @ SK)
        put(f"W1{l}", params["w1"][l]); put(f"B1{l}", params["b1"][l])
        put(f"W2{l}", params["w2"][l])
        put(f"G1{l}", params["g1"][l]); put(f"BE1{l}", params["be1"][l])
        put(f"B2{l}", params["b2"][l])
        put(f"G2{l}", params["g2"][l]); put(f"BE2{l}", params["be2"][l])
    put("WO", np.asarray(params["wo"]).T)          # (1, 32)
    put("BO", np.asarray(params["bo"]))            # (1, 1)
    return jnp.asarray(blob), off, n_layers


# ----------------------------- the fused kernel ----------------------------------
def _make_kernel(off, n_layers, R):
    H, nh, hd, W, G = HIDDEN, HEADS, HEAD_DIM, WIDE, NGRP

    def kernel(x_ref, blob_ref, o_ref, rs_scr, at_scr):
        def blk(name, nrows, ncols):
            o = off[name]
            return blob_ref[o:o + nrows, 0:ncols]

        cs = blk("CS", W, G)
        gs = blk("GS", G, G)
        a_s = blk("AS", G, W)
        fmat = blk("F", W, H)
        perm = blk("PERM", nh * R, nh * R)

        x = x_ref[...]                                           # (R, H)
        for l in range(n_layers):                                # static unroll
            # ---- CosmicAttention: all heads at once on 128-lane operands ----
            q_t = jnp.dot(x, blk(f"WQ{l}", H, W),
                          preferred_element_type=jnp.float32) + blk(f"BQ{l}", 1, W)
            k_t = jnp.dot(x, blk(f"WK{l}", H, W),
                          preferred_element_type=jnp.float32) + blk(f"BK{l}", 1, W)
            v_t = jnp.dot(x, blk(f"WV{l}", H, W),
                          preferred_element_type=jnp.float32) + blk(f"BV{l}", 1, W)

            # scores[r, i*nh+j] = <q_i, k_j> / sqrt(hd)   (scale folded into cs)
            scores = jnp.dot(q_t * k_t, cs, preferred_element_type=jnp.float32)
            m = jnp.max(scores, axis=-1, keepdims=True)          # row max (softmax-safe)
            e = jnp.exp(scores - m)
            denom = jnp.dot(e, gs, preferred_element_type=jnp.float32)
            attn = e / denom                                     # softmax over j per i

            attn_t = jnp.dot(attn, a_s, preferred_element_type=jnp.float32)   # (R, W)
            out_heads = jnp.dot(attn_t * v_t, fmat,
                                preferred_element_type=jnp.float32)           # (R, H)

            # torch: out.transpose(1, 2).contiguous().view(B, S, H)
            for i in range(nh):                                  # row-stack heads
                rs_scr[i * R:(i + 1) * R, :] = out_heads[:, i * hd:(i + 1) * hd]
            y = jnp.dot(perm, rs_scr[...], preferred_element_type=jnp.float32)
            for u in range(nh):                                  # lane-assemble result
                at_scr[:, u * hd:(u + 1) * hd] = y[u * R:(u + 1) * R, :]
            attn_out = at_scr[...]

            # ---- QuantumResonanceLayer: residual + LN1 + FFN(GELU) + residual + LN2
            h = _ln(x + attn_out, blk(f"G1{l}", 1, H), blk(f"BE1{l}", 1, H))
            f = jnp.dot(h, blk(f"W1{l}", H, FFN),
                        preferred_element_type=jnp.float32) + blk(f"B1{l}", 1, FFN)
            f = 0.5 * f * (1.0 + jax.lax.erf(f * _INV_SQRT2))    # exact GELU
            f = jnp.dot(f, blk(f"W2{l}", FFN, H),
                        preferred_element_type=jnp.float32) + blk(f"B2{l}", 1, H)
            x = _ln(h + f, blk(f"G2{l}", 1, H), blk(f"BE2{l}", 1, H))

        # ---- output head Linear(H, 1): VPU multiply + lane reduction ----------
        wo = blk("WO", 1, H)
        bo = blk("BO", 1, 1)
        o_ref[...] = jnp.sum(x * wo, axis=-1, keepdims=True) + bo

    return kernel


# ----------------------------- wrapper --------------------------------------------
def build_forward(off, n_layers, B, S):
    R = B * S
    call = pl.pallas_call(
        _make_kernel(off, n_layers, R),
        out_shape=jax.ShapeDtypeStruct((R, 1), jnp.float32),
        scratch_shapes=[pltpu.VMEM((HEADS * R, HEAD_DIM), jnp.float32),
                        pltpu.VMEM((R, HIDDEN), jnp.float32)],
    )

    @jax.jit
    def forward(x, blob):
        # TODO(synk): QuantumSacredSynthesis.calculate_energy_field is undefined in
        # the reference source; energy field is treated as identity (all-ones).
        return call(x.reshape(R, HIDDEN), blob).reshape(B, S, 1)

    return forward


# ----------------------------- parameters -------------------------------------------
def init_params(key):
    scale = 0.05

    def rnd(k, shape):
        return jax.random.normal(k, shape, jnp.float32) * scale

    stacks = {n: [] for n in
              ("wqkv", "bqkv", "g1", "be1", "w1", "b1", "w2", "b2", "g2", "be2")}
    for l in range(LAYERS):
        ks = jax.random.split(jax.random.fold_in(key, l), 8)
        wq, wk, wv = (rnd(ks[0], (HIDDEN, HIDDEN)), rnd(ks[2], (HIDDEN, HIDDEN)),
                      rnd(ks[4], (HIDDEN, HIDDEN)))
        bq, bk, bv = (rnd(ks[1], (1, HIDDEN)), rnd(ks[3], (1, HIDDEN)),
                      rnd(ks[5], (1, HIDDEN)))
        stacks["wqkv"].append(jnp.concatenate([wq, wk, wv], axis=1))   # (H, 3H)
        stacks["bqkv"].append(jnp.concatenate([bq, bk, bv], axis=1))   # (1, 3H)
        stacks["g1"].append(jnp.ones((1, HIDDEN), jnp.float32))
        stacks["be1"].append(jnp.zeros((1, HIDDEN), jnp.float32))
        stacks["w1"].append(rnd(ks[6], (HIDDEN, FFN)))
        stacks["b1"].append(jnp.zeros((1, FFN), jnp.float32))
        stacks["w2"].append(rnd(ks[7], (FFN, HIDDEN)))
        stacks["b2"].append(jnp.zeros((1, HIDDEN), jnp.float32))
        stacks["g2"].append(jnp.ones((1, HIDDEN), jnp.float32))
        stacks["be2"].append(jnp.zeros((1, HIDDEN), jnp.float32))
    params = {n: jnp.stack(v) for n, v in stacks.items()}
    params["wo"] = rnd(jax.random.fold_in(key, 10_000), (HIDDEN, 1))
    params["bo"] = jnp.zeros((1, 1), jnp.float32)
    return params


# ----------------------------- pure-JAX reference --------------------------------------
def _reference_forward(x, params):
    """Mirror of the PyTorch module (fp32, HIGHEST matmul precision)."""
    B, S, H = x.shape
    nh, hd = HEADS, HEAD_DIM
    hi = jax.lax.Precision.HIGHEST

    def ln(t, g, b):
        mu = jnp.mean(t, axis=-1, keepdims=True)
        var = jnp.mean((t - mu) ** 2, axis=-1, keepdims=True)
        return (t - mu) / jnp.sqrt(var + LN_EPS) * g + b

    h = x
    for l in range(params["wqkv"].shape[0]):
        qkv = jnp.dot(h, params["wqkv"][l], precision=hi) + params["bqkv"][l][0]
        q, k, v = jnp.split(qkv, 3, axis=-1)
        q = q.reshape(B, S, nh, hd)
        k = k.reshape(B, S, nh, hd)
        v = v.reshape(B, S, nh, hd)
        scores = jnp.einsum("bsid,bsjd->bsij", q, k, precision=hi) / math.sqrt(hd)
        attn = jax.nn.softmax(scores, axis=-1)
        out = jnp.einsum("bsij,bsjd->bsid", attn, v, precision=hi)
        out = jnp.transpose(out, (0, 2, 1, 3)).reshape(B, S, H)   # transpose(1,2).view
        h1 = ln(h + out, params["g1"][l][0], params["be1"][l][0])
        f = jnp.dot(h1, params["w1"][l], precision=hi) + params["b1"][l][0]
        f = 0.5 * f * (1.0 + jax.lax.erf(f / math.sqrt(2.0)))
        f = jnp.dot(f, params["w2"][l], precision=hi) + params["b2"][l][0]
        h = ln(h1 + f, params["g2"][l][0], params["be2"][l][0])
    return jnp.dot(h, params["wo"], precision=hi) + params["bo"][0]


# ----------------------------- main -------------------------------------------------------
if __name__ == "__main__":
    key = jax.random.PRNGKey(0)
    x = jax.random.normal(jax.random.fold_in(key, 1), (BATCH, SEQ, HIDDEN), jnp.float32)
    params = init_params(jax.random.fold_in(key, 2))

    blob, off, n_layers = pack_operands(params, BATCH, SEQ)
    forward = build_forward(off, n_layers, BATCH, SEQ)

    y = jax.block_until_ready(forward(x, blob))
    assert y.shape == (BATCH, SEQ, 1) and y.dtype == jnp.float32

    y_ref = _reference_forward(x, params)
    err = float(jnp.max(jnp.abs(y - y_ref)))
    assert err < 1e-3, f"kernel/reference mismatch: {err}"
    print("KERNEL_OK")
</pallas_src>

<mosaic_0001>
module attributes {stable_mosaic.version = 11 : i64} {
  func.func @kernel(%arg0: memref<16x32xf32, #tpu.memory_space<vmem>>, %arg1: memref<888x128xf32, #tpu.memory_space<vmem>>, %arg2: memref<16x1xf32, #tpu.memory_space<vmem>>, %arg3: memref<64x8xf32, #tpu.memory_space<vmem>>, %arg4: memref<16x32xf32, #tpu.memory_space<vmem>>) attributes {dimension_semantics = [], scalar_prefetch = 0 : i64, scratch_operands = 2 : i64, tpu.core_type = #tpu.core_type<tc>} {
    %c0 = arith.constant 0 : index
    %c0_0 = arith.constant 0 : index
    %0 = vector.load %arg1[%c0, %c0_0] : memref<888x128xf32, #tpu.memory_space<vmem>>, vector<128x16xf32>
    %c128 = arith.constant 128 : index
    %c0_1 = arith.constant 0 : index
    %1 = vector.load %arg1[%c128, %c0_1] : memref<888x128xf32, #tpu.memory_space<vmem>>, vector<16x16xf32>
    %c144 = arith.constant 144 : index
    %c0_2 = arith.constant 0 : index
    %2 = vector.load %arg1[%c144, %c0_2] : memref<888x128xf32, #tpu.memory_space<vmem>>, vector<16x128xf32>
    %c160 = arith.constant 160 : index
    %c0_3 = arith.constant 0 : index
    %3 = vector.load %arg1[%c160, %c0_3] : memref<888x128xf32, #tpu.memory_space<vmem>>, vector<128x32xf32>
    %c288 = arith.constant 288 : index
    %c0_4 = arith.constant 0 : index
    %4 = vector.load %arg1[%c288, %c0_4] : memref<888x128xf32, #tpu.memory_space<vmem>>, vector<64x64xf32>
    %c0_5 = arith.constant 0 : index
    %c0_6 = arith.constant 0 : index
    %5 = vector.load %arg0[%c0_5, %c0_6] : memref<16x32xf32, #tpu.memory_space<vmem>>, vector<16x32xf32>
    %c352 = arith.constant 352 : index
    %c0_7 = arith.constant 0 : index
    %6 = vector.load %arg1[%c352, %c0_7] : memref<888x128xf32, #tpu.memory_space<vmem>>, vector<32x128xf32>
    %cst = arith.constant dense<0.000000e+00> : vector<16x128xf32>
    %7 = tpu.matmul %5, %6, %cst {dimension_numbers = #tpu.dot_dimension_numbers<[1], [0], [0], [1], [0, 0, 1, 1], [], []>} : vector<16x32xf32>, vector<32x128xf32>, vector<16x128xf32> -> vector<16x128xf32>
    %c864 = arith.constant 864 : index
    %c0_8 = arith.constant 0 : index
    %8 = vector.load %arg1[%c864, %c0_8] : memref<888x128xf32, #tpu.memory_space<vmem>>, vector<1x128xf32>
    %9 = vector.broadcast %8 : vector<1x128xf32> to vector<16x128xf32>
    %10 = arith.addf %7, %9 : vector<16x128xf32>
    %c384 = arith.constant 384 : index
    %c0_9 = arith.constant 0 : index
    %11 = vector.load %arg1[%c384, %c0_9] : memref<888x128xf32, #tpu.memory_space<vmem>>, vector<32x128xf32>
    %cst_10 = arith.constant dense<0.000000e+00> : vector<16x128xf32>
    %12 = tpu.matmul %5, %11, %cst_10 {dimension_numbers = #tpu.dot_dimension_numbers<[1], [0], [0], [1], [0, 0, 1, 1], [], []>} : vector<16x32xf32>, vector<32x128xf32>, vector<16x128xf32> -> vector<16x128xf32>
    %c865 = arith.constant 865 : index
    %c0_11 = arith.constant 0 : index
    %13 = vector.load %arg1[%c865, %c0_11] : memref<888x128xf32, #tpu.memory_space<vmem>>, vector<1x128xf32>
    %14 = vector.broadcast %13 : vector<1x128xf32> to vector<16x128xf32>
    %15 = arith.addf %12, %14 : vector<16x128xf32>
    %c416 = arith.constant 416 : index
    %c0_12 = arith.constant 0 : index
    %16 = vector.load %arg1[%c416, %c0_12] : memref<888x128xf32, #tpu.memory_space<vmem>>, vector<32x128xf32>
    %cst_13 = arith.constant dense<0.000000e+00> : vector<16x128xf32>
    %17 = tpu.matmul %5, %16, %cst_13 {dimension_numbers = #tpu.dot_dimension_numbers<[1], [0], [0], [1], [0, 0, 1, 1], [], []>} : vector<16x32xf32>, vector<32x128xf32>, vector<16x128xf32> -> vector<16x128xf32>
    %c866 = arith.constant 866 : index
    %c0_14 = arith.constant 0 : index
    %18 = vector.load %arg1[%c866, %c0_14] : memref<888x128xf32, #tpu.memory_space<vmem>>, vector<1x128xf32>
    %19 = vector.broadcast %18 : vector<1x128xf32> to vector<16x128xf32>
    %20 = arith.addf %17, %19 : vector<16x128xf32>
    %21 = arith.mulf %10, %15 : vector<16x128xf32>
    %cst_15 = arith.constant dense<0.000000e+00> : vector<16x16xf32>
    %22 = tpu.matmul %21, %0, %cst_15 {dimension_numbers = #tpu.dot_dimension_numbers<[1], [0], [0], [1], [0, 0, 1, 1], [], []>} : vector<16x128xf32>, vector<128x16xf32>, vector<16x16xf32> -> vector<16x16xf32>
    %cst_16 = arith.constant dense<0xFF800000> : vector<16xf32>
    %23 = vector.multi_reduction <maximumf>, %22, %cst_16 [1] : vector<16x16xf32> to vector<16xf32>
    %24 = vector.shape_cast %23 : vector<16xf32> to vector<16x1xf32>
    %25 = vector.broadcast %24 : vector<16x1xf32> to vector<16x16xf32>
    %26 = arith.subf %22, %25 : vector<16x16xf32>
    %27 = math.exp %26 : vector<16x16xf32>
    %cst_17 = arith.constant dense<0.000000e+00> : vector<16x16xf32>
    %28 = tpu.matmul %27, %1, %cst_17 {dimension_numbers = #tpu.dot_dimension_numbers<[1], [0], [0], [1], [0, 0, 1, 1], [], []>} : vector<16x16xf32>, vector<16x16xf32>, vector<16x16xf32> -> vector<16x16xf32>
    %29 = arith.divf %27, %28 : vector<16x16xf32>
    %cst_18 = arith.constant dense<0.000000e+00> : vector<16x128xf32>
    %30 = tpu.matmul %29, %2, %cst_18 {dimension_numbers = #tpu.dot_dimension_numbers<[1], [0], [0], [1], [0, 0, 1, 1], [], []>} : vector<16x16xf32>, vector<16x128xf32>, vector<16x128xf32> -> vector<16x128xf32>
    %31 = arith.mulf %30, %20 : vector<16x128xf32>
    %cst_19 = arith.constant dense<0.000000e+00> : vector<16x32xf32>
    %32 = tpu.matmul %31, %3, %cst_19 {dimension_numbers = #tpu.dot_dimension_numbers<[1], [0], [0], [1], [0, 0, 1, 1], [], []>} : vector<16x128xf32>, vector<128x32xf32>, vector<16x32xf32> -> vector<16x32xf32>
    %33 = vector.extract_strided_slice %32 {offsets = [0, 0], sizes = [16, 8], strides = [1, 1]} : vector<16x32xf32> to vector<16x8xf32>
    %c0_20 = arith.constant 0 : index
    %c0_21 = arith.constant 0 : index
    %34 = vector.load %arg3[%c0_20, %c0_21] : memref<64x8xf32, #tpu.memory_space<vmem>>, vector<16x8xf32>
    tpu.vector_store %arg3[%c0_20, %c0_21], %33 {strides = array<i32>} : memref<64x8xf32, #tpu.memory_space<vmem>>, vector<16x8xf32>,
    %35 = vector.extract_strided_slice %32 {offsets = [0, 8], sizes = [16, 8], strides = [1, 1]} : vector<16x32xf32> to vector<16x8xf32>
    %c16 = arith.constant 16 : index
    %c0_22 = arith.constant 0 : index
    %36 = vector.load %arg3[%c16, %c0_22] : memref<64x8xf32, #tpu.memory_space<vmem>>, vector<16x8xf32>
    tpu.vector_store %arg3[%c16, %c0_22], %35 {strides = array<i32>} : memref<64x8xf32, #tpu.memory_space<vmem>>, vector<16x8xf32>,
    %37 = vector.extract_strided_slice %32 {offsets = [0, 16], sizes = [16, 8], strides = [1, 1]} : vector<16x32xf32> to vector<16x8xf32>
    %c32 = arith.constant 32 : index
    %c0_23 = arith.constant 0 : index
    %38 = vector.load %arg3[%c32, %c0_23] : memref<64x8xf32, #tpu.memory_space<vmem>>, vector<16x8xf32>
    tpu.vector_store %arg3[%c32, %c0_23], %37 {strides = array<i32>} : memref<64x8xf32, #tpu.memory_space<vmem>>, vector<16x8xf32>,
    %39 = vector.extract_strided_slice %32 {offsets = [0, 24], sizes = [16, 8], strides = [1, 1]} : vector<16x32xf32> to vector<16x8xf32>
    %c48 = arith.constant 48 : index
    %c0_24 = arith.constant 0 : index
    %40 = vector.load %arg3[%c48, %c0_24] : memref<64x8xf32, #tpu.memory_space<vmem>>, vector<16x8xf32>
    tpu.vector_store %arg3[%c48, %c0_24], %39 {strides = array<i32>} : memref<64x8xf32, #tpu.memory_space<vmem>>, vector<16x8xf32>,
    %c0_25 = arith.constant 0 : index
    %c0_26 = arith.constant 0 : index
    %41 = vector.load %arg3[%c0_25, %c0_26] : memref<64x8xf32, #tpu.memory_space<vmem>>, vector<64x8xf32>
    %cst_27 = arith.constant dense<0.000000e+00> : vector<64x8xf32>
    %42 = tpu.matmul %4, %41, %cst_27 {dimension_numbers = #tpu.dot_dimension_numbers<[1], [0], [0], [1], [0, 0, 1, 1], [], []>} : vector<64x64xf32>, vector<64x8xf32>, vector<64x8xf32> -> vector<64x8xf32>
    %43 = vector.extract_strided_slice %42 {offsets = [0, 0], sizes = [16, 8], strides = [1, 1]} : vector<64x8xf32> to vector<16x8xf32>
    %c0_28 = arith.constant 0 : index
    %c0_29 = arith.constant 0 : index
    %44 = vector.load %arg4[%c0_28, %c0_29] : memref<16x32xf32, #tpu.memory_space<vmem>>, vector<16x8xf32>
    tpu.vector_store %arg4[%c0_28, %c0_29], %43 {strides = array<i32>} : memref<16x32xf32, #tpu.memory_space<vmem>>, vector<16x8xf32>,
    %45 = vector.extract_strided_slice %42 {offsets = [16, 0], sizes = [16, 8], strides = [1, 1]} : vector<64x8xf32> to vector<16x8xf32>
    %c0_30 = arith.constant 0 : index
    %c8 = arith.constant 8 : index
    %46 = vector.load %arg4[%c0_30, %c8] : memref<16x32xf32, #tpu.memory_space<vmem>>, vector<16x8xf32>
    tpu.vector_store %arg4[%c0_30, %c8], %45 {strides = array<i32>} : memref<16x32xf32, #tpu.memory_space<vmem>>, vector<16x8xf32>,
    %47 = vector.extract_strided_slice %42 {offsets = [32, 0], sizes = [16, 8], strides = [1, 1]} : vector<64x8xf32> to vector<16x8xf32>
    %c0_31 = arith.constant 0 : index
    %c16_32 = arith.constant 16 : index
    %48 = vector.load %arg4[%c0_31, %c16_32] : memref<16x32xf32, #tpu.memory_space<vmem>>, vector<16x8xf32>
    tpu.vector_store %arg4[%c0_31, %c16_32], %47 {strides = array<i32>} : memref<16x32xf32, #tpu.memory_space<vmem>>, vector<16x8xf32>,
    %49 = vector.extract_strided_slice %42 {offsets = [48, 0], sizes = [16, 8], strides = [1, 1]} : vector<64x8xf32> to vector<16x8xf32>
    %c0_33 = arith.constant 0 : index
    %c24 = arith.constant 24 : index
    %50 = vector.load %arg4[%c0_33, %c24] : memref<16x32xf32, #tpu.memory_space<vmem>>, vector<16x8xf32>
    tpu.vector_store %arg4[%c0_33, %c24], %49 {strides = array<i32>} : memref<16x32xf32, #tpu.memory_space<vmem>>, vector<16x8xf32>,
    %c0_34 = arith.constant 0 : index
    %c0_35 = arith.constant 0 : index
    %51 = vector.load %arg4[%c0_34, %c0_35] : memref<16x32xf32, #tpu.memory_space<vmem>>, vector<16x32xf32>
    %52 = arith.addf %5, %51 : vector<16x32xf32>
    %c868 = arith.constant 868 : index
    %c0_36 = arith.constant 0 : index
    %53 = vector.load %arg1[%c868, %c0_36] : memref<888x128xf32, #tpu.memory_space<vmem>>, vector<1x32xf32>
    %c869 = arith.constant 869 : index
    %c0_37 = arith.constant 0 : index
    %54 = vector.load %arg1[%c869, %c0_37] : memref<888x128xf32, #tpu.memory_space<vmem>>, vector<1x32xf32>
    %cst_38 = arith.constant dense<0.000000e+00> : vector<16xf32>
    %55 = vector.multi_reduction <add>, %52, %cst_38 [1] : vector<16x32xf32> to vector<16xf32>
    %56 = vector.shape_cast %55 : vector<16xf32> to vector<16x1xf32>
    %cst_39 = arith.constant 3.200000e+01 : f32
    %57 = vector.broadcast %cst_39 : f32 to vector<16x1xf32>
    %58 = arith.divf %56, %57 : vector<16x1xf32>
    %59 = vector.broadcast %58 : vector<16x1xf32> to vector<16x32xf32>
    %60 = arith.subf %52, %59 : vector<16x32xf32>
    %61 = arith.mulf %60, %60 : vector<16x32xf32>
    %cst_40 = arith.constant dense<0.000000e+00> : vector<16xf32>
    %62 = vector.multi_reduction <add>, %61, %cst_40 [1] : vector<16x32xf32> to vector<16xf32>
    %63 = vector.shape_cast %62 : vector<16xf32> to vector<16x1xf32>
    %cst_41 = arith.constant 3.200000e+01 : f32
    %64 = vector.broadcast %cst_41 : f32 to vector<16x1xf32>
    %65 = arith.divf %63, %64 : vector<16x1xf32>
    %66 = vector.broadcast %58 : vector<16x1xf32> to vector<16x32xf32>
    %67 = arith.subf %52, %66 : vector<16x32xf32>
    %cst_42 = arith.constant 9.99999974E-6 : f32
    %68 = vector.broadcast %cst_42 : f32 to vector<16x1xf32>
    %69 = arith.addf %65, %68 : vector<16x1xf32>
    %70 = math.rsqrt %69 : vector<16x1xf32>
    %71 = vector.broadcast %70 : vector<16x1xf32> to vector<16x32xf32>
    %72 = arith.mulf %67, %71 : vector<16x32xf32>
    %73 = vector.broadcast %53 : vector<1x32xf32> to vector<16x32xf32>
    %74 = arith.mulf %72, %73 : vector<16x32xf32>
    %75 = vector.broadcast %54 : vector<1x32xf32> to vector<16x32xf32>
    %76 = arith.addf %74, %75 : vector<16x32xf32>
    %c448 = arith.constant 448 : index
    %c0_43 = arith.constant 0 : index
    %77 = vector.load %arg1[%c448, %c0_43] : memref<888x128xf32, #tpu.memory_space<vmem>>, vector<32x128xf32>
    %cst_44 = arith.constant dense<0.000000e+00> : vector<16x128xf32>
    %78 = tpu.matmul %76, %77, %cst_44 {dimension_numbers = #tpu.dot_dimension_numbers<[1], [0], [0], [1], [0, 0, 1, 1], [], []>} : vector<16x32xf32>, vector<32x128xf32>, vector<16x128xf32> -> vector<16x128xf32>
    %c867 = arith.constant 867 : index
    %c0_45 = arith.constant 0 : index
    %79 = vector.load %arg1[%c867, %c0_45] : memref<888x128xf32, #tpu.memory_space<vmem>>, vector<1x128xf32>
    %80 = vector.broadcast %79 : vector<1x128xf32> to vector<16x128xf32>
    %81 = arith.addf %78, %80 : vector<16x128xf32>
    %cst_46 = arith.constant 5.000000e-01 : f32
    %82 = vector.broadcast %cst_46 : f32 to vector<16x128xf32>
    %83 = arith.mulf %82, %81 : vector<16x128xf32>
    %cst_47 = arith.constant 0.707106769 : f32
    %84 = vector.broadcast %cst_47 : f32 to vector<16x128xf32>
    %85 = arith.mulf %81, %84 : vector<16x128xf32>
    %86 = math.erf %85 : vector<16x128xf32>
    %cst_48 = arith.constant 1.000000e+00 : f32
    %87 = vector.broadcast %cst_48 : f32 to vector<16x128xf32>
    %88 = arith.addf %87, %86 : vector<16x128xf32>
    %89 = arith.mulf %83, %88 : vector<16x128xf32>
    %c480 = arith.constant 480 : index
    %c0_49 = arith.constant 0 : index
    %90 = vector.load %arg1[%c480, %c0_49] : memref<888x128xf32, #tpu.memory_space<vmem>>, vector<128x32xf32>
    %cst_50 = arith.constant dense<0.000000e+00> : vector<16x32xf32>
    %91 = tpu.matmul %89, %90, %cst_50 {dimension_numbers = #tpu.dot_dimension_numbers<[1], [0], [0], [1], [0, 0, 1, 1], [], []>} : vector<16x128xf32>, vector<128x32xf32>, vector<16x32xf32> -> vector<16x32xf32>
    %c870 = arith.constant 870 : index
    %c0_51 = arith.constant 0 : index
    %92 = vector.load %arg1[%c870, %c0_51] : memref<888x128xf32, #tpu.memory_space<vmem>>, vector<1x32xf32>
    %93 = vector.broadcast %92 : vector<1x32xf32> to vector<16x32xf32>
    %94 = arith.addf %91, %93 : vector<16x32xf32>
    %95 = arith.addf %76, %94 : vector<16x32xf32>
    %c871 = arith.constant 871 : index
    %c0_52 = arith.constant 0 : index
    %96 = vector.load %arg1[%c871, %c0_52] : memref<888x128xf32, #tpu.memory_space<vmem>>, vector<1x32xf32>
    %c872 = arith.constant 872 : index
    %c0_53 = arith.constant 0 : index
    %97 = vector.load %arg1[%c872, %c0_53] : memref<888x128xf32, #tpu.memory_space<vmem>>, vector<1x32xf32>
    %cst_54 = arith.constant dense<0.000000e+00> : vector<16xf32>
    %98 = vector.multi_reduction <add>, %95, %cst_54 [1] : vector<16x32xf32> to vector<16xf32>
    %99 = vector.shape_cast %98 : vector<16xf32> to vector<16x1xf32>
    %cst_55 = arith.constant 3.200000e+01 : f32
    %100 = vector.broadcast %cst_55 : f32 to vector<16x1xf32>
    %101 = arith.divf %99, %100 : vector<16x1xf32>
    %102 = vector.broadcast %101 : vector<16x1xf32> to vector<16x32xf32>
    %103 = arith.subf %95, %102 : vector<16x32xf32>
    %104 = arith.mulf %103, %103 : vector<16x32xf32>
    %cst_56 = arith.constant dense<0.000000e+00> : vector<16xf32>
    %105 = vector.multi_reduction <add>, %104, %cst_56 [1] : vector<16x32xf32> to vector<16xf32>
    %106 = vector.shape_cast %105 : vector<16xf32> to vector<16x1xf32>
    %cst_57 = arith.constant 3.200000e+01 : f32
    %107 = vector.broadcast %cst_57 : f32 to vector<16x1xf32>
    %108 = arith.divf %106, %107 : vector<16x1xf32>
    %109 = vector.broadcast %101 : vector<16x1xf32> to vector<16x32xf32>
    %110 = arith.subf %95, %109 : vector<16x32xf32>
    %cst_58 = arith.constant 9.99999974E-6 : f32
    %111 = vector.broadcast %cst_58 : f32 to vector<16x1xf32>
    %112 = arith.addf %108, %111 : vector<16x1xf32>
    %113 = math.rsqrt %112 : vector<16x1xf32>
    %114 = vector.broadcast %113 : vector<16x1xf32> to vector<16x32xf32>
    %115 = arith.mulf %110, %114 : vector<16x32xf32>
    %116 = vector.broadcast %96 : vector<1x32xf32> to vector<16x32xf32>
    %117 = arith.mulf %115, %116 : vector<16x32xf32>
    %118 = vector.broadcast %97 : vector<1x32xf32> to vector<16x32xf32>
    %119 = arith.addf %117, %118 : vector<16x32xf32>
    %c608 = arith.constant 608 : index
    %c0_59 = arith.constant 0 : index
    %120 = vector.load %arg1[%c608, %c0_59] : memref<888x128xf32, #tpu.memory_space<vmem>>, vector<32x128xf32>
    %cst_60 = arith.constant dense<0.000000e+00> : vector<16x128xf32>
    %121 = tpu.matmul %119, %120, %cst_60 {dimension_numbers = #tpu.dot_dimension_numbers<[1], [0], [0], [1], [0, 0, 1, 1], [], []>} : vector<16x32xf32>, vector<32x128xf32>, vector<16x128xf32> -> vector<16x128xf32>
    %c873 = arith.constant 873 : index
    %c0_61 = arith.constant 0 : index
    %122 = vector.load %arg1[%c873, %c0_61] : memref<888x128xf32, #tpu.memory_space<vmem>>, vector<1x128xf32>
    %123 = vector.broadcast %122 : vector<1x128xf32> to vector<16x128xf32>
    %124 = arith.addf %121, %123 : vector<16x128xf32>
    %c640 = arith.constant 640 : index
    %c0_62 = arith.constant 0 : index
    %125 = vector.load %arg1[%c640, %c0_62] : memref<888x128xf32, #tpu.memory_space<vmem>>, vector<32x128xf32>
    %cst_63 = arith.constant dense<0.000000e+00> : vector<16x128xf32>
    %126 = tpu.matmul %119, %125, %cst_63 {dimension_numbers = #tpu.dot_dimension_numbers<[1], [0], [0], [1], [0, 0, 1, 1], [], []>} : vector<16x32xf32>, vector<32x128xf32>, vector<16x128xf32> -> vector<16x128xf32>
    %c874 = arith.constant 874 : index
    %c0_64 = arith.constant 0 : index
    %127 = vector.load %arg1[%c874, %c0_64] : memref<888x128xf32, #tpu.memory_space<vmem>>, vector<1x128xf32>
    %128 = vector.broadcast %127 : vector<1x128xf32> to vector<16x128xf32>
    %129 = arith.addf %126, %128 : vector<16x128xf32>
    %c672 = arith.constant 672 : index
    %c0_65 = arith.constant 0 : index
    %130 = vector.load %arg1[%c672, %c0_65] : memref<888x128xf32, #tpu.memory_space<vmem>>, vector<32x128xf32>
    %cst_66 = arith.constant dense<0.000000e+00> : vector<16x128xf32>
    %131 = tpu.matmul %119, %130, %cst_66 {dimension_numbers = #tpu.dot_dimension_numbers<[1], [0], [0], [1], [0, 0, 1, 1], [], []>} : vector<16x32xf32>, vector<32x128xf32>, vector<16x128xf32> -> vector<16x128xf32>
    %c875 = arith.constant 875 : index
    %c0_67 = arith.constant 0 : index
    %132 = vector.load %arg1[%c875, %c0_67] : memref<888x128xf32, #tpu.memory_space<vmem>>, vector<1x128xf32>
    %133 = vector.broadcast %132 : vector<1x128xf32> to vector<16x128xf32>
    %134 = arith.addf %131, %133 : vector<16x128xf32>
    %135 = arith.mulf %124, %129 : vector<16x128xf32>
    %cst_68 = arith.constant dense<0.000000e+00> : vector<16x16xf32>
    %136 = tpu.matmul %135, %0, %cst_68 {dimension_numbers = #tpu.dot_dimension_numbers<[1], [0], [0], [1], [0, 0, 1, 1], [], []>} : vector<16x128xf32>, vector<128x16xf32>, vector<16x16xf32> -> vector<16x16xf32>
    %cst_69 = arith.constant dense<0xFF800000> : vector<16xf32>
    %137 = vector.multi_reduction <maximumf>, %136, %cst_69 [1] : vector<16x16xf32> to vector<16xf32>
    %138 = vector.shape_cast %137 : vector<16xf32> to vector<16x1xf32>
    %139 = vector.broadcast %138 : vector<16x1xf32> to vector<16x16xf32>
    %140 = arith.subf %136, %139 : vector<16x16xf32>
    %141 = math.exp %140 : vector<16x16xf32>
    %cst_70 = arith.constant dense<0.000000e+00> : vector<16x16xf32>
    %142 = tpu.matmul %141, %1, %cst_70 {dimension_numbers = #tpu.dot_dimension_numbers<[1], [0], [0], [1], [0, 0, 1, 1], [], []>} : vector<16x16xf32>, vector<16x16xf32>, vector<16x16xf32> -> vector<16x16xf32>
    %143 = arith.divf %141, %142 : vector<16x16xf32>
    %cst_71 = arith.constant dense<0.000000e+00> : vector<16x128xf32>
    %144 = tpu.matmul %143, %2, %cst_71 {dimension_numbers = #tpu.dot_dimension_numbers<[1], [0], [0], [1], [0, 0, 1, 1], [], []>} : vector<16x16xf32>, vector<16x128xf32>, vector<16x128xf32> -> vector<16x128xf32>
    %145 = arith.mulf %144, %134 : vector<16x128xf32>
    %cst_72 = arith.constant dense<0.000000e+00> : vector<16x32xf32>
    %146 = tpu.matmul %145, %3, %cst_72 {dimension_numbers = #tpu.dot_dimension_numbers<[1], [0], [0], [1], [0, 0, 1, 1], [], []>} : vector<16x128xf32>, vector<128x32xf32>, vector<16x32xf32> -> vector<16x32xf32>
    %147 = vector.extract_strided_slice %146 {offsets = [0, 0], sizes = [16, 8], strides = [1, 1]} : vector<16x32xf32> to vector<16x8xf32>
    %c0_73 = arith.constant 0 : index
    %c0_74 = arith.constant 0 : index
    %148 = vector.load %arg3[%c0_73, %c0_74] : memref<64x8xf32, #tpu.memory_space<vmem>>, vector<16x8xf32>
    tpu.vector_store %arg3[%c0_73, %c0_74], %147 {strides = array<i32>} : memref<64x8xf32, #tpu.memory_space<vmem>>, vector<16x8xf32>,
    %149 = vector.extract_strided_slice %146 {offsets = [0, 8], sizes = [16, 8], strides = [1, 1]} : vector<16x32xf32> to vector<16x8xf32>
    %c16_75 = arith.constant 16 : index
    %c0_76 = arith.constant 0 : index
    %150 = vector.load %arg3[%c16_75, %c0_76] : memref<64x8xf32, #tpu.memory_space<vmem>>, vector<16x8xf32>
    tpu.vector_store %arg3[%c16_75, %c0_76], %149 {strides = array<i32>} : memref<64x8xf32, #tpu.memory_space<vmem>>, vector<16x8xf32>,
    %151 = vector.extract_strided_slice %146 {offsets = [0, 16], sizes = [16, 8], strides = [1, 1]} : vector<16x32xf32> to vector<16x8xf32>
    %c32_77 = arith.constant 32 : index
    %c0_78 = arith.constant 0 : index
    %152 = vector.load %arg3[%c32_77, %c0_78] : memref<64x8xf32, #tpu.memory_space<vmem>>, vector<16x8xf32>
    tpu.vector_store %arg3[%c32_77, %c0_78], %151 {strides = array<i32>} : memref<64x8xf32, #tpu.memory_space<vmem>>, vector<16x8xf32>,
    %153 = vector.extract_strided_slice %146 {offsets = [0, 24], sizes = [16, 8], strides = [1, 1]} : vector<16x32xf32> to vector<16x8xf32>
    %c48_79 = arith.constant 48 : index
    %c0_80 = arith.constant 0 : index
    %154 = vector.load %arg3[%c48_79, %c0_80] : memref<64x8xf32, #tpu.memory_space<vmem>>, vector<16x8xf32>
    tpu.vector_store %arg3[%c48_79, %c0_80], %153 {strides = array<i32>} : memref<64x8xf32, #tpu.memory_space<vmem>>, vector<16x8xf32>,
    %c0_81 = arith.constant 0 : index
    %c0_82 = arith.constant 0 : index
    %155 = vector.load %arg3[%c0_81, %c0_82] : memref<64x8xf32, #tpu.memory_space<vmem>>, vector<64x8xf32>
    %cst_83 = arith.constant dense<0.000000e+00> : vector<64x8xf32>
    %156 = tpu.matmul %4, %155, %cst_83 {dimension_numbers = #tpu.dot_dimension_numbers<[1], [0], [0], [1], [0, 0, 1, 1], [], []>} : vector<64x64xf32>, vector<64x8xf32>, vector<64x8xf32> -> vector<64x8xf32>
    %157 = vector.extract_strided_slice %156 {offsets = [0, 0], sizes = [16, 8], strides = [1, 1]} : vector<64x8xf32> to vector<16x8xf32>
    %c0_84 = arith.constant 0 : index
    %c0_85 = arith.constant 0 : index
    %158 = vector.load %arg4[%c0_84, %c0_85] : memref<16x32xf32, #tpu.memory_space<vmem>>, vector<16x8xf32>
    tpu.vector_store %arg4[%c0_84, %c0_85], %157 {strides = array<i32>} : memref<16x32xf32, #tpu.memory_space<vmem>>, vector<16x8xf32>,
    %159 = vector.extract_strided_slice %156 {offsets = [16, 0], sizes = [16, 8], strides = [1, 1]} : vector<64x8xf32> to vector<16x8xf32>
    %c0_86 = arith.constant 0 : index
    %c8_87 = arith.constant 8 : index
    %160 = vector.load %arg4[%c0_86, %c8_87] : memref<16x32xf32, #tpu.memory_space<vmem>>, vector<16x8xf32>
    tpu.vector_store %arg4[%c0_86, %c8_87], %159 {strides = array<i32>} : memref<16x32xf32, #tpu.memory_space<vmem>>, vector<16x8xf32>,
    %161 = vector.extract_strided_slice %156 {offsets = [32, 0], sizes = [16, 8], strides = [1, 1]} : vector<64x8xf32> to vector<16x8xf32>
    %c0_88 = arith.constant 0 : index
    %c16_89 = arith.constant 16 : index
    %162 = vector.load %arg4[%c0_88, %c16_89] : memref<16x32xf32, #tpu.memory_space<vmem>>, vector<16x8xf32>
    tpu.vector_store %arg4[%c0_88, %c16_89], %161 {strides = array<i32>} : memref<16x32xf32, #tpu.memory_space<vmem>>, vector<16x8xf32>,
    %163 = vector.extract_strided_slice %156 {offsets = [48, 0], sizes = [16, 8], strides = [1, 1]} : vector<64x8xf32> to vector<16x8xf32>
    %c0_90 = arith.constant 0 : index
    %c24_91 = arith.constant 24 : index
    %164 = vector.load %arg4[%c0_90, %c24_91] : memref<16x32xf32, #tpu.memory_space<vmem>>, vector<16x8xf32>
    tpu.vector_store %arg4[%c0_90, %c24_91], %163 {strides = array<i32>} : memref<16x32xf32, #tpu.memory_space<vmem>>, vector<16x8xf32>,
    %c0_92 = arith.constant 0 : index
    %c0_93 = arith.constant 0 : index
    %165 = vector.load %arg4[%c0_92, %c0_93] : memref<16x32xf32, #tpu.memory_space<vmem>>, vector<16x32xf32>
    %166 = arith.addf %119, %165 : vector<16x32xf32>
    %c877 = arith.constant 877 : index
    %c0_94 = arith.constant 0 : index
    %167 = vector.load %arg1[%c877, %c0_94] : memref<888x128xf32, #tpu.memory_space<vmem>>, vector<1x32xf32>
    %c878 = arith.constant 878 : index
    %c0_95 = arith.constant 0 : index
    %168 = vector.load %arg1[%c878, %c0_95] : memref<888x128xf32, #tpu.memory_space<vmem>>, vector<1x32xf32>
    %cst_96 = arith.constant dense<0.000000e+00> : vector<16xf32>
    %169 = vector.multi_reduction <add>, %166, %cst_96 [1] : vector<16x32xf32> to vector<16xf32>
    %170 = vector.shape_cast %169 : vector<16xf32> to vector<16x1xf32>
    %cst_97 = arith.constant 3.200000e+01 : f32
    %171 = vector.broadcast %cst_97 : f32 to vector<16x1xf32>
    %172 = arith.divf %170, %171 : vector<16x1xf32>
    %173 = vector.broadcast %172 : vector<16x1xf32> to vector<16x32xf32>
    %174 = arith.subf %166, %173 : vector<16x32xf32>
    %175 = arith.mulf %174, %174 : vector<16x32xf32>
    %cst_98 = arith.constant dense<0.000000e+00> : vector<16xf32>
    %176 = vector.multi_reduction <add>, %175, %cst_98 [1] : vector<16x32xf32> to vector<16xf32>
    %177 = vector.shape_cast %176 : vector<16xf32> to vector<16x1xf32>
    %cst_99 = arith.constant 3.200000e+01 : f32
    %178 = vector.broadcast %cst_99 : f32 to vector<16x1xf32>
    %179 = arith.divf %177, %178 : vector<16x1xf32>
    %180 = vector.broadcast %172 : vector<16x1xf32> to vector<16x32xf32>
    %181 = arith.subf %166, %180 : vector<16x32xf32>
    %cst_100 = arith.constant 9.99999974E-6 : f32
    %182 = vector.broadcast %cst_100 : f32 to vector<16x1xf32>
    %183 = arith.addf %179, %182 : vector<16x1xf32>
    %184 = math.rsqrt %183 : vector<16x1xf32>
    %185 = vector.broadcast %184 : vector<16x1xf32> to vector<16x32xf32>
    %186 = arith.mulf %181, %185 : vector<16x32xf32>
    %187 = vector.broadcast %167 : vector<1x32xf32> to vector<16x32xf32>
    %188 = arith.mulf %186, %187 : vector<16x32xf32>
    %189 = vector.broadcast %168 : vector<1x32xf32> to vector<16x32xf32>
    %190 = arith.addf %188, %189 : vector<16x32xf32>
    %c704 = arith.constant 704 : index
    %c0_101 = arith.constant 0 : index
    %191 = vector.load %arg1[%c704, %c0_101] : memref<888x128xf32, #tpu.memory_space<vmem>>, vector<32x128xf32>
    %cst_102 = arith.constant dense<0.000000e+00> : vector<16x128xf32>
    %192 = tpu.matmul %190, %191, %cst_102 {dimension_numbers = #tpu.dot_dimension_numbers<[1], [0], [0], [1], [0, 0, 1, 1], [], []>} : vector<16x32xf32>, vector<32x128xf32>, vector<16x128xf32> -> vector<16x128xf32>
    %c876 = arith.constant 876 : index
    %c0_103 = arith.constant 0 : index
    %193 = vector.load %arg1[%c876, %c0_103] : memref<888x128xf32, #tpu.memory_space<vmem>>, vector<1x128xf32>
    %194 = vector.broadcast %193 : vector<1x128xf32> to vector<16x128xf32>
    %195 = arith.addf %192, %194 : vector<16x128xf32>
    %cst_104 = arith.constant 5.000000e-01 : f32
    %196 = vector.broadcast %cst_104 : f32 to vector<16x128xf32>
    %197 = arith.mulf %196, %195 : vector<16x128xf32>
    %cst_105 = arith.constant 0.707106769 : f32
    %198 = vector.broadcast %cst_105 : f32 to vector<16x128xf32>
    %199 = arith.mulf %195, %198 : vector<16x128xf32>
    %200 = math.erf %199 : vector<16x128xf32>
    %cst_106 = arith.constant 1.000000e+00 : f32
    %201 = vector.broadcast %cst_106 : f32 to vector<16x128xf32>
    %202 = arith.addf %201, %200 : vector<16x128xf32>
    %203 = arith.mulf %197, %202 : vector<16x128xf32>
    %c736 = arith.constant 736 : index
    %c0_107 = arith.constant 0 : index
    %204 = vector.load %arg1[%c736, %c0_107] : memref<888x128xf32, #tpu.memory_space<vmem>>, vector<128x32xf32>
    %cst_108 = arith.constant dense<0.000000e+00> : vector<16x32xf32>
    %205 = tpu.matmul %203, %204, %cst_108 {dimension_numbers = #tpu.dot_dimension_numbers<[1], [0], [0], [1], [0, 0, 1, 1], [], []>} : vector<16x128xf32>, vector<128x32xf32>, vector<16x32xf32> -> vector<16x32xf32>
    %c879 = arith.constant 879 : index
    %c0_109 = arith.constant 0 : index
    %206 = vector.load %arg1[%c879, %c0_109] : memref<888x128xf32, #tpu.memory_space<vmem>>, vector<1x32xf32>
    %207 = vector.broadcast %206 : vector<1x32xf32> to vector<16x32xf32>
    %208 = arith.addf %205, %207 : vector<16x32xf32>
    %209 = arith.addf %190, %208 : vector<16x32xf32>
    %c880 = arith.constant 880 : index
    %c0_110 = arith.constant 0 : index
    %210 = vector.load %arg1[%c880, %c0_110] : memref<888x128xf32, #tpu.memory_space<vmem>>, vector<1x32xf32>
    %c881 = arith.constant 881 : index
    %c0_111 = arith.constant 0 : index
    %211 = vector.load %arg1[%c881, %c0_111] : memref<888x128xf32, #tpu.memory_space<vmem>>, vector<1x32xf32>
    %cst_112 = arith.constant dense<0.000000e+00> : vector<16xf32>
    %212 = vector.multi_reduction <add>, %209, %cst_112 [1] : vector<16x32xf32> to vector<16xf32>
    %213 = vector.shape_cast %212 : vector<16xf32> to vector<16x1xf32>
    %cst_113 = arith.constant 3.200000e+01 : f32
    %214 = vector.broadcast %cst_113 : f32 to vector<16x1xf32>
    %215 = arith.divf %213, %214 : vector<16x1xf32>
    %216 = vector.broadcast %215 : vector<16x1xf32> to vector<16x32xf32>
    %217 = arith.subf %209, %216 : vector<16x32xf32>
    %218 = arith.mulf %217, %217 : vector<16x32xf32>
    %cst_114 = arith.constant dense<0.000000e+00> : vector<16xf32>
    %219 = vector.multi_reduction <add>, %218, %cst_114 [1] : vector<16x32xf32> to vector<16xf32>
    %220 = vector.shape_cast %219 : vector<16xf32> to vector<16x1xf32>
    %cst_115 = arith.constant 3.200000e+01 : f32
    %221 = vector.broadcast %cst_115 : f32 to vector<16x1xf32>
    %222 = arith.divf %220, %221 : vector<16x1xf32>
    %223 = vector.broadcast %215 : vector<16x1xf32> to vector<16x32xf32>
    %224 = arith.subf %209, %223 : vector<16x32xf32>
    %cst_116 = arith.constant 9.99999974E-6 : f32
    %225 = vector.broadcast %cst_116 : f32 to vector<16x1xf32>
    %226 = arith.addf %222, %225 : vector<16x1xf32>
    %227 = math.rsqrt %226 : vector<16x1xf32>
    %228 = vector.broadcast %227 : vector<16x1xf32> to vector<16x32xf32>
    %229 = arith.mulf %224, %228 : vector<16x32xf32>
    %230 = vector.broadcast %210 : vector<1x32xf32> to vector<16x32xf32>
    %231 = arith.mulf %229, %230 : vector<16x32xf32>
    %232 = vector.broadcast %211 : vector<1x32xf32> to vector<16x32xf32>
    %233 = arith.addf %231, %232 : vector<16x32xf32>
    %c882 = arith.constant 882 : index
    %c0_117 = arith.constant 0 : index
    %234 = vector.load %arg1[%c882, %c0_117] : memref<888x128xf32, #tpu.memory_space<vmem>>, vector<1x32xf32>
    %c883 = arith.constant 883 : index
    %c0_118 = arith.constant 0 : index
    %235 = vector.load %arg1[%c883, %c0_118] : memref<888x128xf32, #tpu.memory_space<vmem>>, vector<1x1xf32>
    %236 = vector.broadcast %234 : vector<1x32xf32> to vector<16x32xf32>
    %237 = arith.mulf %233, %236 : vector<16x32xf32>
    %cst_119 = arith.constant dense<0.000000e+00> : vector<16xf32>
    %238 = vector.multi_reduction <add>, %237, %cst_119 [1] : vector<16x32xf32> to vector<16xf32>
    %239 = vector.shape_cast %238 : vector<16xf32> to vector<16x1xf32>
    %240 = vector.broadcast %235 : vector<1x1xf32> to vector<16x1xf32>
    %241 = arith.addf %239, %240 : vector<16x1xf32>
    %c0_120 = arith.constant 0 : index
    %c0_121 = arith.constant 0 : index
    %242 = vector.load %arg2[%c0_120, %c0_121] : memref<16x1xf32, #tpu.memory_space<vmem>>, vector<16x1xf32>
    tpu.vector_store %arg2[%c0_120, %c0_121], %241 {strides = array<i32>} : memref<16x1xf32, #tpu.memory_space<vmem>>, vector<16x1xf32>,
    return
  }
}

</mosaic_0001>

<llo_original>
// kernel: forward.1
$region0: #{forward.1}
  #allocation0 [shape = 'u32[]', space=smem, size = 0x4, offset = 0x4, fixed_abs, tag = 'smem constant byte address 0x4 - core index']
  #allocation1 [shape = 'u32[144,128]{1,0:T(1,128)}', space=vmem, size = 0x12000, scoped, tag = 'internal scratch']
  #allocation2 [shape = 'f32[64,8]{1,0:T(8,128)}', space=vmem, size = 0x8000, scoped, tag = 'scratch operand']
  #allocation3 [shape = 'f32[16,32]{1,0:T(8,128)}', space=vmem, size = 0x2000, scoped, tag = 'scratch operand']
  %s0 = inlined_call_operand.hbm [shape: f32[16,32], index: 0, kind: input, shape index: {}]
  %s1 = inlined_call_operand.hbm [shape: f32[888,128], index: 1, kind: input, shape index: {}]
  %s2 = inlined_call_operand.vmem [shape: f32[16,1], index: 2, kind: output, shape index: {}]
  %s3 = sld [smem:[#allocation0]]
  $region26: #{forward.1} parent=0
    _
  %s5 = ssub.s32 1, %s3
  %s6 = scalar_select 0, %s5, %s3
  $region1: #{forward.1} parent=0
    #allocation4 [shape = 'u8[8192]{0}', space=vmem, size = 0x2000, scoped, tag = 'input window, operand 0, single buffered']
    #allocation5 [shape = 's32[1]{0}', space=sflag, size = 0x4, scoped, tag = 'scoped memory for forward.1']
    #allocation6 [shape = 'u8[454656]{0}', space=vmem, size = 0x6f000, scoped, tag = 'input window, operand 1, single buffered']
    #allocation7 [shape = 's32[1]{0}', space=sflag, size = 0x4, scoped, tag = 'scoped memory for forward.1']
    %7 = vsyncpa [#allocation5], 0
    %8 = vsyncpa [#allocation7], 0
    // Predicated region
    $region2: #{forward.1} parent=1 // pred_check
      _
    $region3: #{forward.1} parent=1 // pred_check_branch
      %10 = sbr.rel (0) target = $region5
    $region4: #{forward.1} parent=1 // pred_region
      %s12 = ssub.s32 256, 256
      %13 = vsyncadd [#allocation5], %s12
      %s14 = sshll.u32 [#allocation4], 4
      %s15 = int_to_ptr.vmem [resolvable:$true] %s14
      %20 = dma.hbm_to_vmem [thread:$0]  %s0, 256, %s15, [#allocation5], 128, 128, 8
    $region5: #{forward.1} parent=1 // pred_fallthru
      _
    // Predicated region
    $region6: #{forward.1} parent=1 // pred_check
      _
    $region7: #{forward.1} parent=1 // pred_check_branch
      %22 = sbr.rel (0) target = $region9
    $region8: #{forward.1} parent=1 // pred_region
      %s24 = ssub.s32 14208, 14208
      %25 = vsyncadd [#allocation7], %s24
      %s26 = sshll.u32 [#allocation6], 4
      %s27 = int_to_ptr.vmem [resolvable:$true] %s26
      %32 = dma.hbm_to_vmem [thread:$0]  %s1, 14208, %s27, [#allocation7], 128, 128, 8
    $region9: #{forward.1} parent=1 // pred_fallthru
      _
    // Predicated region
    $region10: #{forward.1} parent=1 // pred_check
      _
    $region11: #{forward.1} parent=1 // pred_check_branch
      %34 = sbr.rel (0) target = $region13
    $region12: #{forward.1} parent=1 // pred_region
      %35 = dma.done [#allocation5], 256
    $region13: #{forward.1} parent=1 // pred_fallthru
      _
    // Predicated region
    $region14: #{forward.1} parent=1 // pred_check
      _
    $region15: #{forward.1} parent=1 // pred_check_branch
      %37 = sbr.rel (0) target = $region17
    $region16: #{forward.1} parent=1 // pred_region
      %38 = dma.done [#allocation7], 14208
    $region17: #{forward.1} parent=1 // pred_fallthru
      _
    %v39 = vld [vmem:[#allocation6] sm:$0xff]
    %v40 = vld [vmem:[#allocation6 + $0x8] sm:$0xff]
    %v41 = vld [vmem:[#allocation6 + $0x10] sm:$0xff]
    %v42 = vld [vmem:[#allocation6 + $0x18] sm:$0xff]
    %v43 = vld [vmem:[#allocation6 + $0x20] sm:$0xff]
    %v44 = vld [vmem:[#allocation6 + $0x28] sm:$0xff]
    %v45 = vld [vmem:[#allocation6 + $0x30] sm:$0xff]
    %v46 = vld [vmem:[#allocation6 + $0x38] sm:$0xff]
    %v47 = vld [vmem:[#allocation6 + $0x40] sm:$0xff]
    %v48 = vld [vmem:[#allocation6 + $0x48] sm:$0xff]
    %v49 = vld [vmem:[#allocation6 + $0x50] sm:$0xff]
    %v50 = vld [vmem:[#allocation6 + $0x58] sm:$0xff]
    %v51 = vld [vmem:[#allocation6 + $0x60] sm:$0xff]
    %v52 = vld [vmem:[#allocation6 + $0x68] sm:$0xff]
    %v53 = vld [vmem:[#allocation6 + $0x70] sm:$0xff]
    %v54 = vld [vmem:[#allocation6 + $0x78] sm:$0xff]
    %v55 = vld [vmem:[#allocation6 + $0x80] sm:$0xff]
    %v56 = vld [vmem:[#allocation6 + $0x88] sm:$0xff]
    %v57 = vld [vmem:[#allocation6 + $0x90] sm:$0xff]
    %v58 = vld [vmem:[#allocation6 + $0x98] sm:$0xff]
    %v59 = vld [vmem:[#allocation6 + $0xa0] sm:$0xff]
    %v60 = vld [vmem:[#allocation6 + $0xa8] sm:$0xff]
    %v61 = vld [vmem:[#allocation6 + $0xb0] sm:$0xff]
    %v62 = vld [vmem:[#allocation6 + $0xb8] sm:$0xff]
    %v63 = vld [vmem:[#allocation6 + $0xc0] sm:$0xff]
    %v64 = vld [vmem:[#allocation6 + $0xc8] sm:$0xff]
    %v65 = vld [vmem:[#allocation6 + $0xd0] sm:$0xff]
    %v66 = vld [vmem:[#allocation6 + $0xd8] sm:$0xff]
    %v67 = vld [vmem:[#allocation6 + $0xe0] sm:$0xff]
    %v68 = vld [vmem:[#allocation6 + $0xe8] sm:$0xff]
    %v69 = vld [vmem:[#allocation6 + $0xf0] sm:$0xff]
    %v70 = vld [vmem:[#allocation6 + $0xf8] sm:$0xff]
    %v71 = vld [vmem:[#allocation6 + $0x100] sm:$0xff]
    %v72 = vld [vmem:[#allocation6 + $0x108] sm:$0xff]
    %v73 = vld [vmem:[#allocation6 + $0x110] sm:$0xff]
    %v74 = vld [vmem:[#allocation6 + $0x118] sm:$0xff]
    %v75 = vld [vmem:[#allocation6 + $0x120] sm:$0xff]
    %v76 = vld [vmem:[#allocation6 + $0x128] sm:$0xff]
    %v77 = vld [vmem:[#allocation6 + $0x130] sm:$0xff]
    %v78 = vld [vmem:[#allocation6 + $0x138] sm:$0xff]
    %v79 = vld [vmem:[#allocation6 + $0x140] sm:$0xff]
    %v80 = vld [vmem:[#allocation6 + $0x148] sm:$0xff]
    %v81 = vld [vmem:[#allocation6 + $0x150] sm:$0xff]
    %v82 = vld [vmem:[#allocation6 + $0x158] sm:$0xff]
    %v83 = vld [vmem:[#allocation4] sm:$0xff]
    %v84 = vld [vmem:[#allocation4 + $0x8] sm:$0xff]
    %v85 = vld [vmem:[#allocation6 + $0x160] sm:$0xff]
    %v86 = vld [vmem:[#allocation6 + $0x168] sm:$0xff]
    %v87 = vld [vmem:[#allocation6 + $0x170] sm:$0xff]
    %v88 = vld [vmem:[#allocation6 + $0x178] sm:$0xff]
    %v89 = vld [vmem:[#allocation6 + $0x360] sm:$0x1]
    %v90 = vlaneseq
    %v91 = vshrl.u32 %v90, 7
    %v92 = vsub.s32 0, %v91
    %v93 = vrot.slane %v89, %v92
    %vm94 = vcmask 261120
    %v96 = vsel %vm94, %v83, 0
    %v99 = vsel %vm94, %v84, 0
    %101 = vmatprep.subr.mxu0 0.0
    %102 = vmatpush1.msra.mxu0 0.0
    %103 = vmatprep.subr.mxu0 0.0
    %104 = vmatpush1.msra.mxu0 0.0
    %105 = vmatprep.subr.mxu0 0.0
    %106 = vmatpush1.msra.mxu0 0.0
    %107 = vmatprep.subr.mxu0 0.0
    %108 = vmatpush1.msra.mxu0 0.0
    %109 = vmatprep.subr.mxu0 0.0
    %110 = vmatpush1.msra.mxu0 0.0
    %111 = vmatprep.subr.mxu0 0.0
    %112 = vmatpush1.msra.mxu0 0.0
    %113 = vmatprep.subr.mxu0 0.0
    %114 = vmatpush1.msra.mxu0 0.0
    %115 = vmatprep.subr.mxu0 0.0
    %116 = vmatpush1.msra.mxu0 0.0
    %117 = vmatprep.subr.mxu0 0.0
    %118 = vmatpush1.msra.mxu0 0.0
    %119 = vmatprep.subr.mxu0 0.0
    %120 = vmatpush1.msra.mxu0 0.0
    %121 = vmatprep.subr.mxu0 0.0
    %122 = vmatpush1.msra.mxu0 0.0
    %123 = vmatprep.subr.mxu0 0.0
    %124 = vmatpush1.msra.mxu0 0.0
    %125 = vmatprep.subr.mxu0 0.0
    %126 = vmatpush1.msra.mxu0 %v88
    %127 = vmatprep.subr.mxu0 0.0
    %128 = vmatpush1.msra.mxu0 %v87
    %129 = vmatprep.subr.mxu0 0.0
    %130 = vmatpush1.msra.mxu0 %v86
    %131 = vmatprep.subr.mxu0 0.0
    %132 = vmatpush1.msra.mxu0 %v85
    %133 = vmatprep.subr.mxu0 0.0
    %134 = vmatpush2.msra.mxu0 0.0
    %135 = vmatprep.subr.mxu0 0.0
    %136 = vmatpush2.msra.mxu0 0.0
    %137 = vmatprep.subr.mxu0 0.0
    %138 = vmatpush2.msra.mxu0 0.0
    %139 = vmatprep.subr.mxu0 0.0
    %140 = vmatpush2.msra.mxu0 0.0
    %141 = vmatprep.subr.mxu0 0.0
    %142 = vmatpush2.msra.mxu0 0.0
    %143 = vmatprep.subr.mxu0 0.0
    %144 = vmatpush2.msra.mxu0 0.0
    %145 = vmatprep.subr.mxu0 0.0
    %146 = vmatpush2.msra.mxu0 0.0
    %147 = vmatprep.subr.mxu0 0.0
    %148 = vmatpush2.msra.mxu0 0.0
    %149 = vmatprep.subr.mxu0 0.0
    %150 = vmatpush2.msra.mxu0 0.0
    %151 = vmatprep.subr.mxu0 0.0
    %152 = vmatpush2.msra.mxu0 0.0
    %153 = vmatprep.subr.mxu0 0.0
    %154 = vmatpush2.msra.mxu0 0.0
    %155 = vmatprep.subr.mxu0 0.0
    %156 = vmatpush2.msra.mxu0 0.0
    %157 = vmatprep.subr.mxu0 0.0
    %158 = vmatpush2.msra.mxu0 0.0
    %159 = vmatprep.subr.mxu0 0.0
    %160 = vmatpush2.msra.mxu0 0.0
    %161 = vmatprep.subr.mxu0 0.0
    %162 = vmatpush2.msra.mxu0 0.0
    %163 = vmatprep.subr.mxu0 0.0
    %164 = vmatpush2.msra.mxu0 0.0
    %165 = vmatprep.mubr.f32.mxu0 0.0
    %166 = vmatmul.mubr.f32.gmra.mxu0 %v96
    %v167 = vpop.f32.mrf.mxu0
    %v168 = vadd.f32 %v93, %v167
    %v169 = vpop.f32.mrf.mxu0
    %170 = vmatprep.mubr.f32.mxu0 0.0
    %171 = vmatmul.mubr.f32.gmra.mxu0 %v99
    %v172 = vpop.f32.mrf.mxu0
    %v173 = vadd.f32 %v93, %v172
    %v174 = vpop.f32.mrf.mxu0
    %175 = vdwg.mxu0
    %v176 = vld [vmem:[#allocation6 + $0x180] sm:$0xff]
    %v177 = vld [vmem:[#allocation6 + $0x188] sm:$0xff]
    %v178 = vld [vmem:[#allocation6 + $0x190] sm:$0xff]
    %v179 = vld [vmem:[#allocation6 + $0x198] sm:$0xff]
    %v180 = vld [vmem:[#allocation6 + $0x361] sm:$0x1]
    %v181 = vlaneseq
    %v182 = vshrl.u32 %v181, 7
    %v183 = vsub.s32 0, %v182
    %v184 = vrot.slane %v180, %v183
    %185 = vmatprep.subr.mxu0 0.0
    %186 = vmatpush1.msra.mxu0 0.0
    %187 = vmatprep.subr.mxu0 0.0
    %188 = vmatpush1.msra.mxu0 0.0
    %189 = vmatprep.subr.mxu0 0.0
    %190 = vmatpush1.msra.mxu0 0.0
    %191 = vmatprep.subr.mxu0 0.0
    %192 = vmatpush1.msra.mxu0 0.0
    %193 = vmatprep.subr.mxu0 0.0
    %194 = vmatpush1.msra.mxu0 0.0
    %195 = vmatprep.subr.mxu0 0.0
    %196 = vmatpush1.msra.mxu0 0.0
    %197 = vmatprep.subr.mxu0 0.0
    %198 = vmatpush1.msra.mxu0 0.0
    %199 = vmatprep.subr.mxu0 0.0
    %200 = vmatpush1.msra.mxu0 0.0
    %201 = vmatprep.subr.mxu0 0.0
    %202 = vmatpush1.msra.mxu0 0.0
    %203 = vmatprep.subr.mxu0 0.0
    %204 = vmatpush1.msra.mxu0 0.0
    %205 = vmatprep.subr.mxu0 0.0
    %206 = vmatpush1.msra.mxu0 0.0
    %207 = vmatprep.subr.mxu0 0.0
    %208 = vmatpush1.msra.mxu0 0.0
    %209 = vmatprep.subr.mxu0 0.0
    %210 = vmatpush1.msra.mxu0 %v179
    %211 = vmatprep.subr.mxu0 0.0
    %212 = vmatpush1.msra.mxu0 %v178
    %213 = vmatprep.subr.mxu0 0.0
    %214 = vmatpush1.msra.mxu0 %v177
    %215 = vmatprep.subr.mxu0 0.0
    %216 = vmatpush1.msra.mxu0 %v176
    %217 = vmatprep.subr.mxu0 0.0
    %218 = vmatpush2.msra.mxu0 0.0
    %219 = vmatprep.subr.mxu0 0.0
    %220 = vmatpush2.msra.mxu0 0.0
    %221 = vmatprep.subr.mxu0 0.0
    %222 = vmatpush2.msra.mxu0 0.0
    %223 = vmatprep.subr.mxu0 0.0
    %224 = vmatpush2.msra.mxu0 0.0
    %225 = vmatprep.subr.mxu0 0.0
    %226 = vmatpush2.msra.mxu0 0.0
    %227 = vmatprep.subr.mxu0 0.0
    %228 = vmatpush2.msra.mxu0 0.0
    %229 = vmatprep.subr.mxu0 0.0
    %230 = vmatpush2.msra.mxu0 0.0
    %231 = vmatprep.subr.mxu0 0.0
    %232 = vmatpush2.msra.mxu0 0.0
    %233 = vmatprep.subr.mxu0 0.0
    %234 = vmatpush2.msra.mxu0 0.0
    %235 = vmatprep.subr.mxu0 0.0
    %236 = vmatpush2.msra.mxu0 0.0
    %237 = vmatprep.subr.mxu0 0.0
    %238 = vmatpush2.msra.mxu0 0.0
    %239 = vmatprep.subr.mxu0 0.0
    %240 = vmatpush2.msra.mxu0 0.0
    %241 = vmatprep.subr.mxu0 0.0
    %242 = vmatpush2.msra.mxu0 0.0
    %243 = vmatprep.subr.mxu0 0.0
    %244 = vmatpush2.msra.mxu0 0.0
    %245 = vmatprep.subr.mxu0 0.0
    %246 = vmatpush2.msra.mxu0 0.0
    %247 = vmatprep.subr.mxu0 0.0
    %248 = vmatpush2.msra.mxu0 0.0
    %249 = vmatprep.mubr.f32.mxu0 0.0
    %250 = vmatmul.mubr.f32.gmra.mxu0 %v96
    %v251 = vpop.f32.mrf.mxu0
    %v252 = vadd.f32 %v184, %v251
    %v253 = vpop.f32.mrf.mxu0
    %254 = vmatprep.mubr.f32.mxu0 0.0
    %255 = vmatmul.mubr.f32.gmra.mxu0 %v99
    %v256 = vpop.f32.mrf.mxu0
    %v257 = vadd.f32 %v184, %v256
    %v258 = vpop.f32.mrf.mxu0
    %259 = vdwg.mxu0
    %v260 = vld [vmem:[#allocation6 + $0x1a0] sm:$0xff]
    %v261 = vld [vmem:[#allocation6 + $0x1a8] sm:$0xff]
    %v262 = vld [vmem:[#allocation6 + $0x1b0] sm:$0xff]
    %v263 = vld [vmem:[#allocation6 + $0x1b8] sm:$0xff]
    %v264 = vld [vmem:[#allocation6 + $0x362] sm:$0x1]
    %v265 = vlaneseq
    %v266 = vshrl.u32 %v265, 7
    %v267 = vsub.s32 0, %v266
    %v268 = vrot.slane %v264, %v267
    %269 = vmatprep.subr.mxu0 0.0
    %270 = vmatpush1.msra.mxu0 0.0
    %271 = vmatprep.subr.mxu0 0.0
    %272 = vmatpush1.msra.mxu0 0.0
    %273 = vmatprep.subr.mxu0 0.0
    %274 = vmatpush1.msra.mxu0 0.0
    %275 = vmatprep.subr.mxu0 0.0
    %276 = vmatpush1.msra.mxu0 0.0
    %277 = vmatprep.subr.mxu0 0.0
    %278 = vmatpush1.msra.mxu0 0.0
    %279 = vmatprep.subr.mxu0 0.0
    %280 = vmatpush1.msra.mxu0 0.0
    %281 = vmatprep.subr.mxu0 0.0
    %282 = vmatpush1.msra.mxu0 0.0
    %283 = vmatprep.subr.mxu0 0.0
    %284 = vmatpush1.msra.mxu0 0.0
    %285 = vmatprep.subr.mxu0 0.0
    %286 = vmatpush1.msra.mxu0 0.0
    %287 = vmatprep.subr.mxu0 0.0
    %288 = vmatpush1.msra.mxu0 0.0
    %289 = vmatprep.subr.mxu0 0.0
    %290 = vmatpush1.msra.mxu0 0.0
    %291 = vmatprep.subr.mxu0 0.0
    %292 = vmatpush1.msra.mxu0 0.0
    %293 = vmatprep.subr.mxu0 0.0
    %294 = vmatpush1.msra.mxu0 %v263
    %295 = vmatprep.subr.mxu0 0.0
    %296 = vmatpush1.msra.mxu0 %v262
    %297 = vmatprep.subr.mxu0 0.0
    %298 = vmatpush1.msra.mxu0 %v261
    %299 = vmatprep.subr.mxu0 0.0
    %300 = vmatpush1.msra.mxu0 %v260
    %301 = vmatprep.subr.mxu0 0.0
    %302 = vmatpush2.msra.mxu0 0.0
    %303 = vmatprep.subr.mxu0 0.0
    %304 = vmatpush2.msra.mxu0 0.0
    %305 = vmatprep.subr.mxu0 0.0
    %306 = vmatpush2.msra.mxu0 0.0
    %307 = vmatprep.subr.mxu0 0.0
    %308 = vmatpush2.msra.mxu0 0.0
    %309 = vmatprep.subr.mxu0 0.0
    %310 = vmatpush2.msra.mxu0 0.0
    %311 = vmatprep.subr.mxu0 0.0
    %312 = vmatpush2.msra.mxu0 0.0
    %313 = vmatprep.subr.mxu0 0.0
    %314 = vmatpush2.msra.mxu0 0.0
    %315 = vmatprep.subr.mxu0 0.0
    %316 = vmatpush2.msra.mxu0 0.0
    %317 = vmatprep.subr.mxu0 0.0
    %318 = vmatpush2.msra.mxu0 0.0
    %319 = vmatprep.subr.mxu0 0.0
    %320 = vmatpush2.msra.mxu0 0.0
    %321 = vmatprep.subr.mxu0 0.0
    %322 = vmatpush2.msra.mxu0 0.0
    %323 = vmatprep.subr.mxu0 0.0
    %324 = vmatpush2.msra.mxu0 0.0
    %325 = vmatprep.subr.mxu0 0.0
    %326 = vmatpush2.msra.mxu0 0.0
    %327 = vmatprep.subr.mxu0 0.0
    %328 = vmatpush2.msra.mxu0 0.0
    %329 = vmatprep.subr.mxu0 0.0
    %330 = vmatpush2.msra.mxu0 0.0
    %331 = vmatprep.subr.mxu0 0.0
    %332 = vmatpush2.msra.mxu0 0.0
    %333 = vmatprep.mubr.f32.mxu0 0.0
    %334 = vmatmul.mubr.f32.gmra.mxu0 %v96
    %v335 = vpop.f32.mrf.mxu0
    %v336 = vadd.f32 %v268, %v335
    %v337 = vpop.f32.mrf.mxu0
    %338 = vmatprep.mubr.f32.mxu0 0.0
    %339 = vmatmul.mubr.f32.gmra.mxu0 %v99
    %v340 = vpop.f32.mrf.mxu0
    %v341 = vadd.f32 %v268, %v340
    %v342 = vpop.f32.mrf.mxu0
    %343 = vdwg.mxu0
    %v344 = vmul.f32 %v168, %v252
    %v345 = vmul.f32 %v173, %v257
    %346 = vmatprep.subr.mxu0 0.0
    %347 = vmatpush1.msra.mxu0 %v54
    %348 = vmatprep.subr.mxu0 0.0
    %349 = vmatpush1.msra.mxu0 %v53
    %350 = vmatprep.subr.mxu0 0.0
    %351 = vmatpush1.msra.mxu0 %v52
    %352 = vmatprep.subr.mxu0 0.0
    %353 = vmatpush1.msra.mxu0 %v51
    %354 = vmatprep.subr.mxu0 0.0
    %355 = vmatpush1.msra.mxu0 %v50
    %356 = vmatprep.subr.mxu0 0.0
    %357 = vmatpush1.msra.mxu0 %v49
    %358 = vmatprep.subr.mxu0 0.0
    %359 = vmatpush1.msra.mxu0 %v48
    %360 = vmatprep.subr.mxu0 0.0
    %361 = vmatpush1.msra.mxu0 %v47
    %362 = vmatprep.subr.mxu0 0.0
    %363 = vmatpush1.msra.mxu0 %v46
    %364 = vmatprep.subr.mxu0 0.0
    %365 = vmatpush1.msra.mxu0 %v45
    %366 = vmatprep.subr.mxu0 0.0
    %367 = vmatpush1.msra.mxu0 %v44
    %368 = vmatprep.subr.mxu0 0.0
    %369 = vmatpush1.msra.mxu0 %v43
    %370 = vmatprep.subr.mxu0 0.0
    %371 = vmatpush1.msra.mxu0 %v42
    %372 = vmatprep.subr.mxu0 0.0
    %373 = vmatpush1.msra.mxu0 %v41
    %374 = vmatprep.subr.mxu0 0.0
    %375 = vmatpush1.msra.mxu0 %v40
    %376 = vmatprep.subr.mxu0 0.0
    %377 = vmatpush1.msra.mxu0 %v39
    %378 = vmatprep.subr.mxu0 0.0
    %379 = vmatpush2.msra.mxu0 0.0
    %380 = vmatprep.subr.mxu0 0.0
    %381 = vmatpush2.msra.mxu0 0.0
    %382 = vmatprep.subr.mxu0 0.0
    %383 = vmatpush2.msra.mxu0 0.0
    %384 = vmatprep.subr.mxu0 0.0
    %385 = vmatpush2.msra.mxu0 0.0
    %386 = vmatprep.subr.mxu0 0.0
    %387 = vmatpush2.msra.mxu0 0.0
    %388 = vmatprep.subr.mxu0 0.0
    %389 = vmatpush2.msra.mxu0 0.0
    %390 = vmatprep.subr.mxu0 0.0
    %391 = vmatpush2.msra.mxu0 0.0
    %392 = vmatprep.subr.mxu0 0.0
    %393 = vmatpush2.msra.mxu0 0.0
    %394 = vmatprep.subr.mxu0 0.0
    %395 = vmatpush2.msra.mxu0 0.0
    %396 = vmatprep.subr.mxu0 0.0
    %397 = vmatpush2.msra.mxu0 0.0
    %398 = vmatprep.subr.mxu0 0.0
    %399 = vmatpush2.msra.mxu0 0.0
    %400 = vmatprep.subr.mxu0 0.0
    %401 = vmatpush2.msra.mxu0 0.0
    %402 = vmatprep.subr.mxu0 0.0
    %403 = vmatpush2.msra.mxu0 0.0
    %404 = vmatprep.subr.mxu0 0.0
    %405 = vmatpush2.msra.mxu0 0.0
    %406 = vmatprep.subr.mxu0 0.0
    %407 = vmatpush2.msra.mxu0 0.0
    %408 = vmatprep.subr.mxu0 0.0
    %409 = vmatpush2.msra.mxu0 0.0
    %410 = vmatprep.mubr.f32.mxu0 0.0
    %411 = vmatmul.mubr.f32.gmra.mxu0 %v344
    %v412 = vpop.f32.mrf.mxu0
    %v413 = vadd.f32 0.0, %v412
    %v414 = vpop.f32.mrf.mxu0
    %415 = vmatprep.mubr.f32.mxu0 0.0
    %416 = vmatmul.mubr.f32.gmra.mxu0 %v345
    %v417 = vpop.f32.mrf.mxu0
    %v418 = vadd.f32 0.0, %v417
    %v419 = vpop.f32.mrf.mxu0
    %420 = vdwg.mxu0
    %vm421 = vcmask 130048
    %v422 = vsel %vm421, %v413, -inf
    %423 = vmax.xlane.f32.xlu0 %v422
    %v424 = vpop.xlane.xlu0 %423
    %v425 = vsel %vm421, %v418, -inf
    %426 = vmax.xlane.f32.xlu0 %v425
    %v427 = vpop.xlane.xlu0 %426
    %v428 = vsub.f32 %v413, %v424
    %v429 = vsub.f32 %v418, %v427
    %v430 = vmul.f32 %v428, 1.442695
    %v431 = vpow.pop %v430
    %v432 = vmul.f32 %v429, 1.442695
    %v433 = vpow.pop %v432
    %v435 = vsel %vm421, %v431, 0
    %v438 = vsel %vm421, %v433, 0
    %440 = vmatprep.subr.mxu0 0.0
    %441 = vmatpush1.msra.mxu0 0.0
    %442 = vmatprep.subr.mxu0 0.0
    %443 = vmatpush1.msra.mxu0 0.0
    %444 = vmatprep.subr.mxu0 0.0
    %445 = vmatpush1.msra.mxu0 0.0
    %446 = vmatprep.subr.mxu0 0.0
    %447 = vmatpush1.msra.mxu0 0.0
    %448 = vmatprep.subr.mxu0 0.0
    %449 = vmatpush1.msra.mxu0 0.0
    %450 = vmatprep.subr.mxu0 0.0
    %451 = vmatpush1.msra.mxu0 0.0
    %452 = vmatprep.subr.mxu0 0.0
    %453 = vmatpush1.msra.mxu0 0.0
    %454 = vmatprep.subr.mxu0 0.0
    %455 = vmatpush1.msra.mxu0 0.0
    %456 = vmatprep.subr.mxu0 0.0
    %457 = vmatpush1.msra.mxu0 0.0
    %458 = vmatprep.subr.mxu0 0.0
    %459 = vmatpush1.msra.mxu0 0.0
    %460 = vmatprep.subr.mxu0 0.0
    %461 = vmatpush1.msra.mxu0 0.0
    %462 = vmatprep.subr.mxu0 0.0
    %463 = vmatpush1.msra.mxu0 0.0
    %464 = vmatprep.subr.mxu0 0.0
    %465 = vmatpush1.msra.mxu0 0.0
    %466 = vmatprep.subr.mxu0 0.0
    %467 = vmatpush1.msra.mxu0 0.0
    %468 = vmatprep.subr.mxu0 0.0
    %469 = vmatpush1.msra.mxu0 %v56
    %470 = vmatprep.subr.mxu0 0.0
    %471 = vmatpush1.msra.mxu0 %v55
    %472 = vmatprep.subr.mxu0 0.0
    %473 = vmatpush2.msra.mxu0 0.0
    %474 = vmatprep.subr.mxu0 0.0
    %475 = vmatpush2.msra.mxu0 0.0
    %476 = vmatprep.subr.mxu0 0.0
    %477 = vmatpush2.msra.mxu0 0.0
    %478 = vmatprep.subr.mxu0 0.0
    %479 = vmatpush2.msra.mxu0 0.0
    %480 = vmatprep.subr.mxu0 0.0
    %481 = vmatpush2.msra.mxu0 0.0
    %482 = vmatprep.subr.mxu0 0.0
    %483 = vmatpush2.msra.mxu0 0.0
    %484 = vmatprep.subr.mxu0 0.0
    %485 = vmatpush2.msra.mxu0 0.0
    %486 = vmatprep.subr.mxu0 0.0
    %487 = vmatpush2.msra.mxu0 0.0
    %488 = vmatprep.subr.mxu0 0.0
    %489 = vmatpush2.msra.mxu0 0.0
    %490 = vmatprep.subr.mxu0 0.0
    %491 = vmatpush2.msra.mxu0 0.0
    %492 = vmatprep.subr.mxu0 0.0
    %493 = vmatpush2.msra.mxu0 0.0
    %494 = vmatprep.subr.mxu0 0.0
    %495 = vmatpush2.msra.mxu0 0.0
    %496 = vmatprep.subr.mxu0 0.0
    %497 = vmatpush2.msra.mxu0 0.0
    %498 = vmatprep.subr.mxu0 0.0
    %499 = vmatpush2.msra.mxu0 0.0
    %500 = vmatprep.subr.mxu0 0.0
    %501 = vmatpush2.msra.mxu0 0.0
    %502 = vmatprep.subr.mxu0 0.0
    %503 = vmatpush2.msra.mxu0 0.0
    %504 = vmatprep.mubr.f32.mxu0 0.0
    %505 = vmatmul.mubr.f32.gmra.mxu0 %v435
    %v506 = vpop.f32.mrf.mxu0
    %v507 = vadd.f32 0.0, %v506
    %v508 = vpop.f32.mrf.mxu0
    %509 = vmatprep.mubr.f32.mxu0 0.0
    %510 = vmatmul.mubr.f32.gmra.mxu0 %v438
    %v511 = vpop.f32.mrf.mxu0
    %v512 = vadd.f32 0.0, %v511
    %v513 = vpop.f32.mrf.mxu0
    %514 = vdwg.mxu0
    %v515 = vrcp.pop %v507
    %v516 = vmul.f32 %v431, %v515
    %v517 = vrcp.pop %v512
    %v518 = vmul.f32 %v433, %v517
    %v520 = vsel %vm421, %v516, 0
    %v523 = vsel %vm421, %v518, 0
    %525 = vmatprep.subr.mxu0 0.0
    %526 = vmatpush1.msra.mxu0 0.0
    %527 = vmatprep.subr.mxu0 0.0
    %528 = vmatpush1.msra.mxu0 0.0
    %529 = vmatprep.subr.mxu0 0.0
    %530 = vmatpush1.msra.mxu0 0.0
    %531 = vmatprep.subr.mxu0 0.0
    %532 = vmatpush1.msra.mxu0 0.0
    %533 = vmatprep.subr.mxu0 0.0
    %534 = vmatpush1.msra.mxu0 0.0
    %535 = vmatprep.subr.mxu0 0.0
    %536 = vmatpush1.msra.mxu0 0.0
    %537 = vmatprep.subr.mxu0 0.0
    %538 = vmatpush1.msra.mxu0 0.0
    %539 = vmatprep.subr.mxu0 0.0
    %540 = vmatpush1.msra.mxu0 0.0
    %541 = vmatprep.subr.mxu0 0.0
    %542 = vmatpush1.msra.mxu0 0.0
    %543 = vmatprep.subr.mxu0 0.0
    %544 = vmatpush1.msra.mxu0 0.0
    %545 = vmatprep.subr.mxu0 0.0
    %546 = vmatpush1.msra.mxu0 0.0
    %547 = vmatprep.subr.mxu0 0.0
    %548 = vmatpush1.msra.mxu0 0.0
    %549 = vmatprep.subr.mxu0 0.0
    %550 = vmatpush1.msra.mxu0 0.0
    %551 = vmatprep.subr.mxu0 0.0
    %552 = vmatpush1.msra.mxu0 0.0
    %553 = vmatprep.subr.mxu0 0.0
    %554 = vmatpush1.msra.mxu0 %v58
    %555 = vmatprep.subr.mxu0 0.0
    %556 = vmatpush1.msra.mxu0 %v57
    %557 = vmatprep.subr.mxu0 0.0
    %558 = vmatpush2.msra.mxu0 0.0
    %559 = vmatprep.subr.mxu0 0.0
    %560 = vmatpush2.msra.mxu0 0.0
    %561 = vmatprep.subr.mxu0 0.0
    %562 = vmatpush2.msra.mxu0 0.0
    %563 = vmatprep.subr.mxu0 0.0
    %564 = vmatpush2.msra.mxu0 0.0
    %565 = vmatprep.subr.mxu0 0.0
    %566 = vmatpush2.msra.mxu0 0.0
    %567 = vmatprep.subr.mxu0 0.0
    %568 = vmatpush2.msra.mxu0 0.0
    %569 = vmatprep.subr.mxu0 0.0
    %570 = vmatpush2.msra.mxu0 0.0
    %571 = vmatprep.subr.mxu0 0.0
    %572 = vmatpush2.msra.mxu0 0.0
    %573 = vmatprep.subr.mxu0 0.0
    %574 = vmatpush2.msra.mxu0 0.0
    %575 = vmatprep.subr.mxu0 0.0
    %576 = vmatpush2.msra.mxu0 0.0
    %577 = vmatprep.subr.mxu0 0.0
    %578 = vmatpush2.msra.mxu0 0.0
    %579 = vmatprep.subr.mxu0 0.0
    %580 = vmatpush2.msra.mxu0 0.0
    %581 = vmatprep.subr.mxu0 0.0
    %582 = vmatpush2.msra.mxu0 0.0
    %583 = vmatprep.subr.mxu0 0.0
    %584 = vmatpush2.msra.mxu0 0.0
    %585 = vmatprep.subr.mxu0 0.0
    %586 = vmatpush2.msra.mxu0 0.0
    %587 = vmatprep.subr.mxu0 0.0
    %588 = vmatpush2.msra.mxu0 0.0
    %589 = vmatprep.mubr.f32.mxu0 0.0
    %590 = vmatmul.mubr.f32.gmra.mxu0 %v520
    %v591 = vpop.f32.mrf.mxu0
    %v592 = vadd.f32 0.0, %v591
    %v593 = vpop.f32.mrf.mxu0
    %594 = vmatprep.mubr.f32.mxu0 0.0
    %595 = vmatmul.mubr.f32.gmra.mxu0 %v523
    %v596 = vpop.f32.mrf.mxu0
    %v597 = vadd.f32 0.0, %v596
    %v598 = vpop.f32.mrf.mxu0
    %599 = vdwg.mxu0
    %v600 = vmul.f32 %v592, %v336
    %v601 = vmul.f32 %v597, %v341
    %602 = vmatprep.subr.mxu0 0.0
    %603 = vmatpush1.msra.mxu0 %v74
    %604 = vmatprep.subr.mxu0 0.0
    %605 = vmatpush1.msra.mxu0 %v73
    %606 = vmatprep.subr.mxu0 0.0
    %607 = vmatpush1.msra.mxu0 %v72
    %608 = vmatprep.subr.mxu0 0.0
    %609 = vmatpush1.msra.mxu0 %v71
    %610 = vmatprep.subr.mxu0 0.0
    %611 = vmatpush1.msra.mxu0 %v70
    %612 = vmatprep.subr.mxu0 0.0
    %613 = vmatpush1.msra.mxu0 %v69
    %614 = vmatprep.subr.mxu0 0.0
    %615 = vmatpush1.msra.mxu0 %v68
    %616 = vmatprep.subr.mxu0 0.0
    %617 = vmatpush1.msra.mxu0 %v67
    %618 = vmatprep.subr.mxu0 0.0
    %619 = vmatpush1.msra.mxu0 %v66
    %620 = vmatprep.subr.mxu0 0.0
    %621 = vmatpush1.msra.mxu0 %v65
    %622 = vmatprep.subr.mxu0 0.0
    %623 = vmatpush1.msra.mxu0 %v64
    %624 = vmatprep.subr.mxu0 0.0
    %625 = vmatpush1.msra.mxu0 %v63
    %626 = vmatprep.subr.mxu0 0.0
    %627 = vmatpush1.msra.mxu0 %v62
    %628 = vmatprep.subr.mxu0 0.0
    %629 = vmatpush1.msra.mxu0 %v61
    %630 = vmatprep.subr.mxu0 0.0
    %631 = vmatpush1.msra.mxu0 %v60
    %632 = vmatprep.subr.mxu0 0.0
    %633 = vmatpush1.msra.mxu0 %v59
    %634 = vmatprep.subr.mxu0 0.0
    %635 = vmatpush2.msra.mxu0 0.0
    %636 = vmatprep.subr.mxu0 0.0
    %637 = vmatpush2.msra.mxu0 0.0
    %638 = vmatprep.subr.mxu0 0.0
    %639 = vmatpush2.msra.mxu0 0.0
    %640 = vmatprep.subr.mxu0 0.0
    %641 = vmatpush2.msra.mxu0 0.0
    %642 = vmatprep.subr.mxu0 0.0
    %643 = vmatpush2.msra.mxu0 0.0
    %644 = vmatprep.subr.mxu0 0.0
    %645 = vmatpush2.msra.mxu0 0.0
    %646 = vmatprep.subr.mxu0 0.0
    %647 = vmatpush2.msra.mxu0 0.0
    %648 = vmatprep.subr.mxu0 0.0
    %649 = vmatpush2.msra.mxu0 0.0
    %650 = vmatprep.subr.mxu0 0.0
    %651 = vmatpush2.msra.mxu0 0.0
    %652 = vmatprep.subr.mxu0 0.0
    %653 = vmatpush2.msra.mxu0 0.0
    %654 = vmatprep.subr.mxu0 0.0
    %655 = vmatpush2.msra.mxu0 0.0
    %656 = vmatprep.subr.mxu0 0.0
    %657 = vmatpush2.msra.mxu0 0.0
    %658 = vmatprep.subr.mxu0 0.0
    %659 = vmatpush2.msra.mxu0 0.0
    %660 = vmatprep.subr.mxu0 0.0
    %661 = vmatpush2.msra.mxu0 0.0
    %662 = vmatprep.subr.mxu0 0.0
    %663 = vmatpush2.msra.mxu0 0.0
    %664 = vmatprep.subr.mxu0 0.0
    %665 = vmatpush2.msra.mxu0 0.0
    %666 = vmatprep.mubr.f32.mxu0 0.0
    %667 = vmatmul.mubr.f32.gmra.mxu0 %v600
    %v668 = vpop.f32.mrf.mxu0
    %v669 = vadd.f32 0.0, %v668
    %v670 = vpop.f32.mrf.mxu0
    %671 = vmatprep.mubr.f32.mxu0 0.0
    %672 = vmatmul.mubr.f32.gmra.mxu0 %v601
    %v673 = vpop.f32.mrf.mxu0
    %v674 = vadd.f32 0.0, %v673
    %v675 = vpop.f32.mrf.mxu0
    %676 = vdwg.mxu0
    %vm677 = vcmask 64512
    %678 = vst.msk [vmem:[#allocation2] sm:$0xff] %vm677, %v669
    %679 = vst.msk [vmem:[#allocation2 + $0x8] sm:$0xff] %vm677, %v674
    %682 = vrot.lane.b32.xlu0 %v669, 120
    %v683 = vpop.permute.xlu0 %682
    %684 = vrot.lane.b32.xlu0 %v674, 120
    %v685 = vpop.permute.xlu0 %684
    %688 = vst.msk [vmem:[#allocation2 + $0x10] sm:$0xff] %vm677, %v683
    %689 = vst.msk [vmem:[#allocation2 + $0x18] sm:$0xff] %vm677, %v685
    %690 = vrot.lane.b32.xlu0 %v669, 112
    %v691 = vpop.permute.xlu0 %690
    %692 = vrot.lane.b32.xlu0 %v674, 112
    %v693 = vpop.permute.xlu0 %692
    %696 = vst.msk [vmem:[#allocation2 + $0x20] sm:$0xff] %vm677, %v691
    %697 = vst.msk [vmem:[#allocation2 + $0x28] sm:$0xff] %vm677, %v693
    %698 = vrot.lane.b32.xlu0 %v669, 104
    %v699 = vpop.permute.xlu0 %698
    %700 = vrot.lane.b32.xlu0 %v674, 104
    %v701 = vpop.permute.xlu0 %700
    %704 = vst.msk [vmem:[#allocation2 + $0x30] sm:$0xff] %vm677, %v699
    %705 = vst.msk [vmem:[#allocation2 + $0x38] sm:$0xff] %vm677, %v701
    %v706 = vld [vmem:[#allocation2] sm:$0xff]
    %v707 = vld [vmem:[#allocation2 + $0x8] sm:$0xff]
    %v708 = vld [vmem:[#allocation2 + $0x10] sm:$0xff]
    %v709 = vld [vmem:[#allocation2 + $0x18] sm:$0xff]
    %v710 = vld [vmem:[#allocation2 + $0x20] sm:$0xff]
    %v711 = vld [vmem:[#allocation2 + $0x28] sm:$0xff]
    %v712 = vld [vmem:[#allocation2 + $0x30] sm:$0xff]
    %v713 = vld [vmem:[#allocation2 + $0x38] sm:$0xff]
    %vm714 = vcmask 523264
    %v716 = vsel %vm714, %v75, 0
    %v719 = vsel %vm714, %v76, 0
    %v722 = vsel %vm714, %v77, 0
    %v725 = vsel %vm714, %v78, 0
    %v728 = vsel %vm714, %v79, 0
    %v731 = vsel %vm714, %v80, 0
    %v734 = vsel %vm714, %v81, 0
    %v737 = vsel %vm714, %v82, 0
    %739 = vmatprep.subr.mxu0 0.0
    %740 = vmatpush1.msra.mxu0 0.0
    %741 = vmatprep.subr.mxu0 0.0
    %742 = vmatpush1.msra.mxu0 0.0
    %743 = vmatprep.subr.mxu0 0.0
    %744 = vmatpush1.msra.mxu0 0.0
    %745 = vmatprep.subr.mxu0 0.0
    %746 = vmatpush1.msra.mxu0 0.0
    %747 = vmatprep.subr.mxu0 0.0
    %748 = vmatpush1.msra.mxu0 0.0
    %749 = vmatprep.subr.mxu0 0.0
    %750 = vmatpush1.msra.mxu0 0.0
    %751 = vmatprep.subr.mxu0 0.0
    %752 = vmatpush1.msra.mxu0 0.0
    %753 = vmatprep.subr.mxu0 0.0
    %754 = vmatpush1.msra.mxu0 0.0
    %755 = vmatprep.subr.mxu0 0.0
    %756 = vmatpush1.msra.mxu0 %v713
    %757 = vmatprep.subr.mxu0 0.0
    %758 = vmatpush1.msra.mxu0 %v712
    %759 = vmatprep.subr.mxu0 0.0
    %760 = vmatpush1.msra.mxu0 %v711
    %761 = vmatprep.subr.mxu0 0.0
    %762 = vmatpush1.msra.mxu0 %v710
    %763 = vmatprep.subr.mxu0 0.0
    %764 = vmatpush1.msra.mxu0 %v709
    %765 = vmatprep.subr.mxu0 0.0
    %766 = vmatpush1.msra.mxu0 %v708
    %767 = vmatprep.subr.mxu0 0.0
    %768 = vmatpush1.msra.mxu0 %v707
    %769 = vmatprep.subr.mxu0 0.0
    %770 = vmatpush1.msra.mxu0 %v706
    %771 = vmatprep.subr.mxu0 0.0
    %772 = vmatpush2.msra.mxu0 0.0
    %773 = vmatprep.subr.mxu0 0.0
    %774 = vmatpush2.msra.mxu0 0.0
    %775 = vmatprep.subr.mxu0 0.0
    %776 = vmatpush2.msra.mxu0 0.0
    %777 = vmatprep.subr.mxu0 0.0
    %778 = vmatpush2.msra.mxu0 0.0
    %779 = vmatprep.subr.mxu0 0.0
    %780 = vmatpush2.msra.mxu0 0.0
    %781 = vmatprep.subr.mxu0 0.0
    %782 = vmatpush2.msra.mxu0 0.0
    %783 = vmatprep.subr.mxu0 0.0
    %784 = vmatpush2.msra.mxu0 0.0
    %785 = vmatprep.subr.mxu0 0.0
    %786 = vmatpush2.msra.mxu0 0.0
    %787 = vmatprep.subr.mxu0 0.0
    %788 = vmatpush2.msra.mxu0 0.0
    %789 = vmatprep.subr.mxu0 0.0
    %790 = vmatpush2.msra.mxu0 0.0
    %791 = vmatprep.subr.mxu0 0.0
    %792 = vmatpush2.msra.mxu0 0.0
    %793 = vmatprep.subr.mxu0 0.0
    %794 = vmatpush2.msra.mxu0 0.0
    %795 = vmatprep.subr.mxu0 0.0
    %796 = vmatpush2.msra.mxu0 0.0
    %797 = vmatprep.subr.mxu0 0.0
    %798 = vmatpush2.msra.mxu0 0.0
    %799 = vmatprep.subr.mxu0 0.0
    %800 = vmatpush2.msra.mxu0 0.0
    %801 = vmatprep.subr.mxu0 0.0
    %802 = vmatpush2.msra.mxu0 0.0
    %803 = vmatprep.mubr.f32.mxu0 0.0
    %804 = vmatmul.mubr.f32.gmra.mxu0 %v716
    %v805 = vpop.f32.mrf.mxu0
    %v806 = vadd.f32 0.0, %v805
    %v807 = vpop.f32.mrf.mxu0
    %808 = vmatprep.mubr.f32.mxu0 0.0
    %809 = vmatmul.mubr.f32.gmra.mxu0 %v719
    %v810 = vpop.f32.mrf.mxu0
    %v811 = vadd.f32 0.0, %v810
    %v812 = vpop.f32.mrf.mxu0
    %813 = vmatprep.mubr.f32.mxu0 0.0
    %814 = vmatmul.mubr.f32.gmra.mxu0 %v722
    %v815 = vpop.f32.mrf.mxu0
    %v816 = vadd.f32 0.0, %v815
    %v817 = vpop.f32.mrf.mxu0
    %818 = vmatprep.mubr.f32.mxu0 0.0
    %819 = vmatmul.mubr.f32.gmra.mxu0 %v725
    %v820 = vpop.f32.mrf.mxu0
    %v821 = vadd.f32 0.0, %v820
    %v822 = vpop.f32.mrf.mxu0
    %823 = vmatprep.mubr.f32.mxu0 0.0
    %824 = vmatmul.mubr.f32.gmra.mxu0 %v728
    %v825 = vpop.f32.mrf.mxu0
    %v826 = vadd.f32 0.0, %v825
    %v827 = vpop.f32.mrf.mxu0
    %828 = vmatprep.mubr.f32.mxu0 0.0
    %829 = vmatmul.mubr.f32.gmra.mxu0 %v731
    %v830 = vpop.f32.mrf.mxu0
    %v831 = vadd.f32 0.0, %v830
    %v832 = vpop.f32.mrf.mxu0
    %833 = vmatprep.mubr.f32.mxu0 0.0
    %834 = vmatmul.mubr.f32.gmra.mxu0 %v734
    %v835 = vpop.f32.mrf.mxu0
    %v836 = vadd.f32 0.0, %v835
    %v837 = vpop.f32.mrf.mxu0
    %838 = vmatprep.mubr.f32.mxu0 0.0
    %839 = vmatmul.mubr.f32.gmra.mxu0 %v737
    %v840 = vpop.f32.mrf.mxu0
    %v841 = vadd.f32 0.0, %v840
    %v842 = vpop.f32.mrf.mxu0
    %843 = vdwg.mxu0
    %844 = vst.msk [vmem:[#allocation3] sm:$0xff] %vm677, %v806
    %845 = vst.msk [vmem:[#allocation3 + $0x8] sm:$0xff] %vm677, %v811
    %848 = vrot.lane.b32.xlu0 %v816, 8
    %v849 = vpop.permute.xlu0 %848
    %850 = vrot.lane.b32.xlu0 %v821, 8
    %v851 = vpop.permute.xlu0 %850
    %vm854 = vcmask 130112
    %855 = vst.msk [vmem:[#allocation3] sm:$0xff] %vm854, %v849
    %856 = vst.msk [vmem:[#allocation3 + $0x8] sm:$0xff] %vm854, %v851
    %859 = vrot.lane.b32.xlu0 %v826, 16
    %v860 = vpop.permute.xlu0 %859
    %861 = vrot.lane.b32.xlu0 %v831, 16
    %v862 = vpop.permute.xlu0 %861
    %vm865 = vcmask 195712
    %866 = vst.msk [vmem:[#allocation3] sm:$0xff] %vm865, %v860
    %867 = vst.msk [vmem:[#allocation3 + $0x8] sm:$0xff] %vm865, %v862
    %870 = vrot.lane.b32.xlu0 %v836, 24
    %v871 = vpop.permute.xlu0 %870
    %872 = vrot.lane.b32.xlu0 %v841, 24
    %v873 = vpop.permute.xlu0 %872
    %vm876 = vcmask 261312
    %877 = vst.msk [vmem:[#allocation3] sm:$0xff] %vm876, %v871
    %878 = vst.msk [vmem:[#allocation3 + $0x8] sm:$0xff] %vm876, %v873
    %v879 = vld [vmem:[#allocation3] sm:$0xff]
    %v880 = vld [vmem:[#allocation3 + $0x8] sm:$0xff]
    %v881 = vadd.f32 %v83, %v879
    %v882 = vadd.f32 %v84, %v880
    %v883 = vld [vmem:[#allocation6 + $0x364] sm:$0x1]
    %v884 = vld [vmem:[#allocation6 + $0x365] sm:$0x1]
    %v885 = vsel %vm94, %v881, 0.0
    %886 = vadd.xlane.f32.xlu0 %v885
    %v887 = vpop.xlane.xlu0 %886
    %v888 = vsel %vm94, %v882, 0.0
    %889 = vadd.xlane.f32.xlu0 %v888
    %v890 = vpop.xlane.xlu0 %889
    %v891 = vrcp.pop 32.0
    %v892 = vmul.f32 %v887, %v891
    %v893 = vmul.f32 %v890, %v891
    %v894 = vsub.f32 %v881, %v892
    %v895 = vsub.f32 %v882, %v893
    %v896 = vmul.f32 %v894, %v894
    %v897 = vmul.f32 %v895, %v895
    %v898 = vsel %vm94, %v896, 0.0
    %899 = vadd.xlane.f32.xlu0 %v898
    %v900 = vpop.xlane.xlu0 %899
    %v901 = vsel %vm94, %v897, 0.0
    %902 = vadd.xlane.f32.xlu0 %v901
    %v903 = vpop.xlane.xlu0 %902
    %v904 = vmul.f32 %v900, %v891
    %v905 = vmul.f32 %v903, %v891
    %v906 = vadd.f32 %v904, 1e-05
    %v907 = vadd.f32 %v905, 1e-05
    %v908 = vrsqrt.pop %v906
    %v909 = vrsqrt.pop %v907
    %v910 = vmul.f32 %v894, %v908
    %v911 = vmul.f32 %v895, %v909
    %v912 = vlaneseq
    %v913 = vshrl.u32 %v912, 7
    %v914 = vsub.s32 0, %v913
    %v915 = vrot.slane %v883, %v914
    %v916 = vmul.f32 %v910, %v915
    %v917 = vmul.f32 %v911, %v915
    %v918 = vlaneseq
    %v919 = vshrl.u32 %v918, 7
    %v920 = vsub.s32 0, %v919
    %v921 = vrot.slane %v884, %v920
    %v922 = vadd.f32 %v916, %v921
    %v923 = vadd.f32 %v917, %v921
    %v924 = vld [vmem:[#allocation6 + $0x1c0] sm:$0xff]
    %v925 = vld [vmem:[#allocation6 + $0x1c8] sm:$0xff]
    %v926 = vld [vmem:[#allocation6 + $0x1d0] sm:$0xff]
    %v927 = vld [vmem:[#allocation6 + $0x1d8] sm:$0xff]
    %v928 = vld [vmem:[#allocation6 + $0x363] sm:$0x1]
    %v929 = vlaneseq
    %v930 = vshrl.u32 %v929, 7
    %v931 = vsub.s32 0, %v930
    %v932 = vrot.slane %v928, %v931
    %v934 = vsel %vm94, %v922, 0
    %v937 = vsel %vm94, %v923, 0
    %939 = vmatprep.subr.mxu0 0.0
    %940 = vmatpush1.msra.mxu0 0.0
    %941 = vmatprep.subr.mxu0 0.0
    %942 = vmatpush1.msra.mxu0 0.0
    %943 = vmatprep.subr.mxu0 0.0
    %944 = vmatpush1.msra.mxu0 0.0
    %945 = vmatprep.subr.mxu0 0.0
    %946 = vmatpush1.msra.mxu0 0.0
    %947 = vmatprep.subr.mxu0 0.0
    %948 = vmatpush1.msra.mxu0 0.0
    %949 = vmatprep.subr.mxu0 0.0
    %950 = vmatpush1.msra.mxu0 0.0
    %951 = vmatprep.subr.mxu0 0.0
    %952 = vmatpush1.msra.mxu0 0.0
    %953 = vmatprep.subr.mxu0 0.0
    %954 = vmatpush1.msra.mxu0 0.0
    %955 = vmatprep.subr.mxu0 0.0
    %956 = vmatpush1.msra.mxu0 0.0
    %957 = vmatprep.subr.mxu0 0.0
    %958 = vmatpush1.msra.mxu0 0.0
    %959 = vmatprep.subr.mxu0 0.0
    %960 = vmatpush1.msra.mxu0 0.0
    %961 = vmatprep.subr.mxu0 0.0
    %962 = vmatpush1.msra.mxu0 0.0
    %963 = vmatprep.subr.mxu0 0.0
    %964 = vmatpush1.msra.mxu0 %v927
    %965 = vmatprep.subr.mxu0 0.0
    %966 = vmatpush1.msra.mxu0 %v926
    %967 = vmatprep.subr.mxu0 0.0
    %968 = vmatpush1.msra.mxu0 %v925
    %969 = vmatprep.subr.mxu0 0.0
    %970 = vmatpush1.msra.mxu0 %v924
    %971 = vmatprep.subr.mxu0 0.0
    %972 = vmatpush2.msra.mxu0 0.0
    %973 = vmatprep.subr.mxu0 0.0
    %974 = vmatpush2.msra.mxu0 0.0
    %975 = vmatprep.subr.mxu0 0.0
    %976 = vmatpush2.msra.mxu0 0.0
    %977 = vmatprep.subr.mxu0 0.0
    %978 = vmatpush2.msra.mxu0 0.0
    %979 = vmatprep.subr.mxu0 0.0
    %980 = vmatpush2.msra.mxu0 0.0
    %981 = vmatprep.subr.mxu0 0.0
    %982 = vmatpush2.msra.mxu0 0.0
    %983 = vmatprep.subr.mxu0 0.0
    %984 = vmatpush2.msra.mxu0 0.0
    %985 = vmatprep.subr.mxu0 0.0
    %986 = vmatpush2.msra.mxu0 0.0
    %987 = vmatprep.subr.mxu0 0.0
    %988 = vmatpush2.msra.mxu0 0.0
    %989 = vmatprep.subr.mxu0 0.0
    %990 = vmatpush2.msra.mxu0 0.0
    %991 = vmatprep.subr.mxu0 0.0
    %992 = vmatpush2.msra.mxu0 0.0
    %993 = vmatprep.subr.mxu0 0.0
    %994 = vmatpush2.msra.mxu0 0.0
    %995 = vmatprep.subr.mxu0 0.0
    %996 = vmatpush2.msra.mxu0 0.0
    %997 = vmatprep.subr.mxu0 0.0
    %998 = vmatpush2.msra.mxu0 0.0
    %999 = vmatprep.subr.mxu0 0.0
    %1000 = vmatpush2.msra.mxu0 0.0
    %1001 = vmatprep.subr.mxu0 0.0
    %1002 = vmatpush2.msra.mxu0 0.0
    %1003 = vmatprep.mubr.f32.mxu0 0.0
    %1004 = vmatmul.mubr.f32.gmra.mxu0 %v934
    %v1005 = vpop.f32.mrf.mxu0
    %v1006 = vadd.f32 %v932, %v1005
    %v1007 = vpop.f32.mrf.mxu0
    %1008 = vmatprep.mubr.f32.mxu0 0.0
    %1009 = vmatmul.mubr.f32.gmra.mxu0 %v937
    %v1010 = vpop.f32.mrf.mxu0
    %v1011 = vadd.f32 %v932, %v1010
    %v1012 = vpop.f32.mrf.mxu0
    %1013 = vdwg.mxu0
    %v1014 = vmul.f32 %v1006, 0.5
    %v1015 = vmul.f32 %v1011, 0.5
    %v1016 = vmul.f32 %v1006, 0.70710677
    %v1017 = vmul.f32 %v1011, 0.70710677
    %v1018 = verf.f32.pop %v1016
    %v1019 = verf.f32.pop %v1017
    %v1020 = vadd.f32 %v1018, 1.0
    %v1021 = vadd.f32 %v1019, 1.0
    %v1022 = vmul.f32 %v1014, %v1020
    %v1023 = vmul.f32 %v1015, %v1021
    %v1024 = vld [vmem:[#allocation6 + $0x1e0] sm:$0xff]
    %v1025 = vld [vmem:[#allocation6 + $0x1e8] sm:$0xff]
    %v1026 = vld [vmem:[#allocation6 + $0x1f0] sm:$0xff]
    %v1027 = vld [vmem:[#allocation6 + $0x1f8] sm:$0xff]
    %v1028 = vld [vmem:[#allocation6 + $0x200] sm:$0xff]
    %v1029 = vld [vmem:[#allocation6 + $0x208] sm:$0xff]
    %v1030 = vld [vmem:[#allocation6 + $0x210] sm:$0xff]
    %v1031 = vld [vmem:[#allocation6 + $0x218] sm:$0xff]
    %v1032 = vld [vmem:[#allocation6 + $0x220] sm:$0xff]
    %v1033 = vld [vmem:[#allocation6 + $0x228] sm:$0xff]
    %v1034 = vld [vmem:[#allocation6 + $0x230] sm:$0xff]
    %v1035 = vld [vmem:[#allocation6 + $0x238] sm:$0xff]
    %v1036 = vld [vmem:[#allocation6 + $0x240] sm:$0xff]
    %v1037 = vld [vmem:[#allocation6 + $0x248] sm:$0xff]
    %v1038 = vld [vmem:[#allocation6 + $0x250] sm:$0xff]
    %v1039 = vld [vmem:[#allocation6 + $0x258] sm:$0xff]
    %v1040 = vld [vmem:[#allocation6 + $0x366] sm:$0x1]
    %v1041 = vlaneseq
    %v1042 = vshrl.u32 %v1041, 7
    %v1043 = vsub.s32 0, %v1042
    %v1044 = vrot.slane %v1040, %v1043
    %1045 = vmatprep.subr.mxu0 0.0
    %1046 = vmatpush1.msra.mxu0 %v1039
    %1047 = vmatprep.subr.mxu0 0.0
    %1048 = vmatpush1.msra.mxu0 %v1038
    %1049 = vmatprep.subr.mxu0 0.0
    %1050 = vmatpush1.msra.mxu0 %v1037
    %1051 = vmatprep.subr.mxu0 0.0
    %1052 = vmatpush1.msra.mxu0 %v1036
    %1053 = vmatprep.subr.mxu0 0.0
    %1054 = vmatpush1.msra.mxu0 %v1035
    %1055 = vmatprep.subr.mxu0 0.0
    %1056 = vmatpush1.msra.mxu0 %v1034
    %1057 = vmatprep.subr.mxu0 0.0
    %1058 = vmatpush1.msra.mxu0 %v1033
    %1059 = vmatprep.subr.mxu0 0.0
    %1060 = vmatpush1.msra.mxu0 %v1032
    %1061 = vmatprep.subr.mxu0 0.0
    %1062 = vmatpush1.msra.mxu0 %v1031
    %1063 = vmatprep.subr.mxu0 0.0
    %1064 = vmatpush1.msra.mxu0 %v1030
    %1065 = vmatprep.subr.mxu0 0.0
    %1066 = vmatpush1.msra.mxu0 %v1029
    %1067 = vmatprep.subr.mxu0 0.0
    %1068 = vmatpush1.msra.mxu0 %v1028
    %1069 = vmatprep.subr.mxu0 0.0
    %1070 = vmatpush1.msra.mxu0 %v1027
    %1071 = vmatprep.subr.mxu0 0.0
    %1072 = vmatpush1.msra.mxu0 %v1026
    %1073 = vmatprep.subr.mxu0 0.0
    %1074 = vmatpush1.msra.mxu0 %v1025
    %1075 = vmatprep.subr.mxu0 0.0
    %1076 = vmatpush1.msra.mxu0 %v1024
    %1077 = vmatprep.subr.mxu0 0.0
    %1078 = vmatpush2.msra.mxu0 0.0
    %1079 = vmatprep.subr.mxu0 0.0
    %1080 = vmatpush2.msra.mxu0 0.0
    %1081 = vmatprep.subr.mxu0 0.0
    %1082 = vmatpush2.msra.mxu0 0.0
    %1083 = vmatprep.subr.mxu0 0.0
    %1084 = vmatpush2.msra.mxu0 0.0
    %1085 = vmatprep.subr.mxu0 0.0
    %1086 = vmatpush2.msra.mxu0 0.0
    %1087 = vmatprep.subr.mxu0 0.0
    %1088 = vmatpush2.msra.mxu0 0.0
    %1089 = vmatprep.subr.mxu0 0.0
    %1090 = vmatpush2.msra.mxu0 0.0
    %1091 = vmatprep.subr.mxu0 0.0
    %1092 = vmatpush2.msra.mxu0 0.0
    %1093 = vmatprep.subr.mxu0 0.0
    %1094 = vmatpush2.msra.mxu0 0.0
    %1095 = vmatprep.subr.mxu0 0.0
    %1096 = vmatpush2.msra.mxu0 0.0
    %1097 = vmatprep.subr.mxu0 0.0
    %1098 = vmatpush2.msra.mxu0 0.0
    %1099 = vmatprep.subr.mxu0 0.0
    %1100 = vmatpush2.msra.mxu0 0.0
    %1101 = vmatprep.subr.mxu0 0.0
    %1102 = vmatpush2.msra.mxu0 0.0
    %1103 = vmatprep.subr.mxu0 0.0
    %1104 = vmatpush2.msra.mxu0 0.0
    %1105 = vmatprep.subr.mxu0 0.0
    %1106 = vmatpush2.msra.mxu0 0.0
    %1107 = vmatprep.subr.mxu0 0.0
    %1108 = vmatpush2.msra.mxu0 0.0
    %1109 = vmatprep.mubr.f32.mxu0 0.0
    %1110 = vmatmul.mubr.f32.gmra.mxu0 %v1022
    %v1111 = vpop.f32.mrf.mxu0
    %v1112 = vadd.f32 %v1044, %v1111
    %v1113 = vpop.f32.mrf.mxu0
    %1114 = vmatprep.mubr.f32.mxu0 0.0
    %1115 = vmatmul.mubr.f32.gmra.mxu0 %v1023
    %v1116 = vpop.f32.mrf.mxu0
    %v1117 = vadd.f32 %v1044, %v1116
    %v1118 = vpop.f32.mrf.mxu0
    %1119 = vdwg.mxu0
    %v1120 = vadd.f32 %v922, %v1112
    %v1121 = vadd.f32 %v923, %v1117
    %v1122 = vld [vmem:[#allocation6 + $0x367] sm:$0x1]
    %v1123 = vld [vmem:[#allocation6 + $0x368] sm:$0x1]
    %v1124 = vsel %vm94, %v1120, 0.0
    %1125 = vadd.xlane.f32.xlu0 %v1124
    %v1126 = vpop.xlane.xlu0 %1125
    %v1127 = vsel %vm94, %v1121, 0.0
    %1128 = vadd.xlane.f32.xlu0 %v1127
    %v1129 = vpop.xlane.xlu0 %1128
    %v1130 = vmul.f32 %v1126, %v891
    %v1131 = vmul.f32 %v1129, %v891
    %v1132 = vsub.f32 %v1120, %v1130
    %v1133 = vsub.f32 %v1121, %v1131
    %v1134 = vmul.f32 %v1132, %v1132
    %v1135 = vmul.f32 %v1133, %v1133
    %v1136 = vsel %vm94, %v1134, 0.0
    %1137 = vadd.xlane.f32.xlu0 %v1136
    %v1138 = vpop.xlane.xlu0 %1137
    %v1139 = vsel %vm94, %v1135, 0.0
    %1140 = vadd.xlane.f32.xlu0 %v1139
    %v1141 = vpop.xlane.xlu0 %1140
    %v1142 = vmul.f32 %v1138, %v891
    %v1143 = vmul.f32 %v1141, %v891
    %v1144 = vadd.f32 %v1142, 1e-05
    %v1145 = vadd.f32 %v1143, 1e-05
    %v1146 = vrsqrt.pop %v1144
    %v1147 = vrsqrt.pop %v1145
    %v1148 = vmul.f32 %v1132, %v1146
    %v1149 = vmul.f32 %v1133, %v1147
    %v1150 = vlaneseq
    %v1151 = vshrl.u32 %v1150, 7
    %v1152 = vsub.s32 0, %v1151
    %v1153 = vrot.slane %v1122, %v1152
    %v1154 = vmul.f32 %v1148, %v1153
    %v1155 = vmul.f32 %v1149, %v1153
    %v1156 = vlaneseq
    %v1157 = vshrl.u32 %v1156, 7
    %v1158 = vsub.s32 0, %v1157
    %v1159 = vrot.slane %v1123, %v1158
    %v1160 = vadd.f32 %v1154, %v1159
    %v1161 = vadd.f32 %v1155, %v1159
    %v1162 = vld [vmem:[#allocation6 + $0x260] sm:$0xff]
    %v1163 = vld [vmem:[#allocation6 + $0x268] sm:$0xff]
    %v1164 = vld [vmem:[#allocation6 + $0x270] sm:$0xff]
    %v1165 = vld [vmem:[#allocation6 + $0x278] sm:$0xff]
    %v1166 = vld [vmem:[#allocation6 + $0x369] sm:$0x1]
    %v1167 = vlaneseq
    %v1168 = vshrl.u32 %v1167, 7
    %v1169 = vsub.s32 0, %v1168
    %v1170 = vrot.slane %v1166, %v1169
    %v1172 = vsel %vm94, %v1160, 0
    %v1175 = vsel %vm94, %v1161, 0
    %1177 = vmatprep.subr.mxu0 0.0
    %1178 = vmatpush1.msra.mxu0 0.0
    %1179 = vmatprep.subr.mxu0 0.0
    %1180 = vmatpush1.msra.mxu0 0.0
    %1181 = vmatprep.subr.mxu0 0.0
    %1182 = vmatpush1.msra.mxu0 0.0
    %1183 = vmatprep.subr.mxu0 0.0
    %1184 = vmatpush1.msra.mxu0 0.0
    %1185 = vmatprep.subr.mxu0 0.0
    %1186 = vmatpush1.msra.mxu0 0.0
    %1187 = vmatprep.subr.mxu0 0.0
    %1188 = vmatpush1.msra.mxu0 0.0
    %1189 = vmatprep.subr.mxu0 0.0
    %1190 = vmatpush1.msra.mxu0 0.0
    %1191 = vmatprep.subr.mxu0 0.0
    %1192 = vmatpush1.msra.mxu0 0.0
    %1193 = vmatprep.subr.mxu0 0.0
    %1194 = vmatpush1.msra.mxu0 0.0
    %1195 = vmatprep.subr.mxu0 0.0
    %1196 = vmatpush1.msra.mxu0 0.0
    %1197 = vmatprep.subr.mxu0 0.0
    %1198 = vmatpush1.msra.mxu0 0.0
    %1199 = vmatprep.subr.mxu0 0.0
    %1200 = vmatpush1.msra.mxu0 0.0
    %1201 = vmatprep.subr.mxu0 0.0
    %1202 = vmatpush1.msra.mxu0 %v1165
    %1203 = vmatprep.subr.mxu0 0.0
    %1204 = vmatpush1.msra.mxu0 %v1164
    %1205 = vmatprep.subr.mxu0 0.0
    %1206 = vmatpush1.msra.mxu0 %v1163
    %1207 = vmatprep.subr.mxu0 0.0
    %1208 = vmatpush1.msra.mxu0 %v1162
    %1209 = vmatprep.subr.mxu0 0.0
    %1210 = vmatpush2.msra.mxu0 0.0
    %1211 = vmatprep.subr.mxu0 0.0
    %1212 = vmatpush2.msra.mxu0 0.0
    %1213 = vmatprep.subr.mxu0 0.0
    %1214 = vmatpush2.msra.mxu0 0.0
    %1215 = vmatprep.subr.mxu0 0.0
    %1216 = vmatpush2.msra.mxu0 0.0
    %1217 = vmatprep.subr.mxu0 0.0
    %1218 = vmatpush2.msra.mxu0 0.0
    %1219 = vmatprep.subr.mxu0 0.0
    %1220 = vmatpush2.msra.mxu0 0.0
    %1221 = vmatprep.subr.mxu0 0.0
    %1222 = vmatpush2.msra.mxu0 0.0
    %1223 = vmatprep.subr.mxu0 0.0
    %1224 = vmatpush2.msra.mxu0 0.0
    %1225 = vmatprep.subr.mxu0 0.0
    %1226 = vmatpush2.msra.mxu0 0.0
    %1227 = vmatprep.subr.mxu0 0.0
    %1228 = vmatpush2.msra.mxu0 0.0
    %1229 = vmatprep.subr.mxu0 0.0
    %1230 = vmatpush2.msra.mxu0 0.0
    %1231 = vmatprep.subr.mxu0 0.0
    %1232 = vmatpush2.msra.mxu0 0.0
    %1233 = vmatprep.subr.mxu0 0.0
    %1234 = vmatpush2.msra.mxu0 0.0
    %1235 = vmatprep.subr.mxu0 0.0
    %1236 = vmatpush2.msra.mxu0 0.0
    %1237 = vmatprep.subr.mxu0 0.0
    %1238 = vmatpush2.msra.mxu0 0.0
    %1239 = vmatprep.subr.mxu0 0.0
    %1240 = vmatpush2.msra.mxu0 0.0
    %1241 = vmatprep.mubr.f32.mxu0 0.0
    %1242 = vmatmul.mubr.f32.gmra.mxu0 %v1172
    %v1243 = vpop.f32.mrf.mxu0
    %v1244 = vadd.f32 %v1170, %v1243
    %v1245 = vpop.f32.mrf.mxu0
    %1246 = vmatprep.mubr.f32.mxu0 0.0
    %1247 = vmatmul.mubr.f32.gmra.mxu0 %v1175
    %v1248 = vpop.f32.mrf.mxu0
    %v1249 = vadd.f32 %v1170, %v1248
    %v1250 = vpop.f32.mrf.mxu0
    %1251 = vdwg.mxu0
    %v1252 = vld [vmem:[#allocation6 + $0x280] sm:$0xff]
    %v1253 = vld [vmem:[#allocation6 + $0x288] sm:$0xff]
    %v1254 = vld [vmem:[#allocation6 + $0x290] sm:$0xff]
    %v1255 = vld [vmem:[#allocation6 + $0x298] sm:$0xff]
    %v1256 = vld [vmem:[#allocation6 + $0x36a] sm:$0x1]
    %v1257 = vlaneseq
    %v1258 = vshrl.u32 %v1257, 7
    %v1259 = vsub.s32 0, %v1258
    %v1260 = vrot.slane %v1256, %v1259
    %1261 = vmatprep.subr.mxu0 0.0
    %1262 = vmatpush1.msra.mxu0 0.0
    %1263 = vmatprep.subr.mxu0 0.0
    %1264 = vmatpush1.msra.mxu0 0.0
    %1265 = vmatprep.subr.mxu0 0.0
    %1266 = vmatpush1.msra.mxu0 0.0
    %1267 = vmatprep.subr.mxu0 0.0
    %1268 = vmatpush1.msra.mxu0 0.0
    %1269 = vmatprep.subr.mxu0 0.0
    %1270 = vmatpush1.msra.mxu0 0.0
    %1271 = vmatprep.subr.mxu0 0.0
    %1272 = vmatpush1.msra.mxu0 0.0
    %1273 = vmatprep.subr.mxu0 0.0
    %1274 = vmatpush1.msra.mxu0 0.0
    %1275 = vmatprep.subr.mxu0 0.0
    %1276 = vmatpush1.msra.mxu0 0.0
    %1277 = vmatprep.subr.mxu0 0.0
    %1278 = vmatpush1.msra.mxu0 0.0
    %1279 = vmatprep.subr.mxu0 0.0
    %1280 = vmatpush1.msra.mxu0 0.0
    %1281 = vmatprep.subr.mxu0 0.0
    %1282 = vmatpush1.msra.mxu0 0.0
    %1283 = vmatprep.subr.mxu0 0.0
    %1284 = vmatpush1.msra.mxu0 0.0
    %1285 = vmatprep.subr.mxu0 0.0
    %1286 = vmatpush1.msra.mxu0 %v1255
    %1287 = vmatprep.subr.mxu0 0.0
    %1288 = vmatpush1.msra.mxu0 %v1254
    %1289 = vmatprep.subr.mxu0 0.0
    %1290 = vmatpush1.msra.mxu0 %v1253
    %1291 = vmatprep.subr.mxu0 0.0
    %1292 = vmatpush1.msra.mxu0 %v1252
    %1293 = vmatprep.subr.mxu0 0.0
    %1294 = vmatpush2.msra.mxu0 0.0
    %1295 = vmatprep.subr.mxu0 0.0
    %1296 = vmatpush2.msra.mxu0 0.0
    %1297 = vmatprep.subr.mxu0 0.0
    %1298 = vmatpush2.msra.mxu0 0.0
    %1299 = vmatprep.subr.mxu0 0.0
    %1300 = vmatpush2.msra.mxu0 0.0
    %1301 = vmatprep.subr.mxu0 0.0
    %1302 = vmatpush2.msra.mxu0 0.0
    %1303 = vmatprep.subr.mxu0 0.0
    %1304 = vmatpush2.msra.mxu0 0.0
    %1305 = vmatprep.subr.mxu0 0.0
    %1306 = vmatpush2.msra.mxu0 0.0
    %1307 = vmatprep.subr.mxu0 0.0
    %1308 = vmatpush2.msra.mxu0 0.0
    %1309 = vmatprep.subr.mxu0 0.0
    %1310 = vmatpush2.msra.mxu0 0.0
    %1311 = vmatprep.subr.mxu0 0.0
    %1312 = vmatpush2.msra.mxu0 0.0
    %1313 = vmatprep.subr.mxu0 0.0
    %1314 = vmatpush2.msra.mxu0 0.0
    %1315 = vmatprep.subr.mxu0 0.0
    %1316 = vmatpush2.msra.mxu0 0.0
    %1317 = vmatprep.subr.mxu0 0.0
    %1318 = vmatpush2.msra.mxu0 0.0
    %1319 = vmatprep.subr.mxu0 0.0
    %1320 = vmatpush2.msra.mxu0 0.0
    %1321 = vmatprep.subr.mxu0 0.0
    %1322 = vmatpush2.msra.mxu0 0.0
    %1323 = vmatprep.subr.mxu0 0.0
    %1324 = vmatpush2.msra.mxu0 0.0
    %1325 = vmatprep.mubr.f32.mxu0 0.0
    %1326 = vmatmul.mubr.f32.gmra.mxu0 %v1172
    %v1327 = vpop.f32.mrf.mxu0
    %v1328 = vadd.f32 %v1260, %v1327
    %v1329 = vpop.f32.mrf.mxu0
    %1330 = vmatprep.mubr.f32.mxu0 0.0
    %1331 = vmatmul.mubr.f32.gmra.mxu0 %v1175
    %v1332 = vpop.f32.mrf.mxu0
    %v1333 = vadd.f32 %v1260, %v1332
    %v1334 = vpop.f32.mrf.mxu0
    %1335 = vdwg.mxu0
    %v1336 = vld [vmem:[#allocation6 + $0x2a0] sm:$0xff]
    %v1337 = vld [vmem:[#allocation6 + $0x2a8] sm:$0xff]
    %v1338 = vld [vmem:[#allocation6 + $0x2b0] sm:$0xff]
    %v1339 = vld [vmem:[#allocation6 + $0x2b8] sm:$0xff]
    %v1340 = vld [vmem:[#allocation6 + $0x36b] sm:$0x1]
    %v1341 = vlaneseq
    %v1342 = vshrl.u32 %v1341, 7
    %v1343 = vsub.s32 0, %v1342
    %v1344 = vrot.slane %v1340, %v1343
    %1345 = vmatprep.subr.mxu0 0.0
    %1346 = vmatpush1.msra.mxu0 0.0
    %1347 = vmatprep.subr.mxu0 0.0
    %1348 = vmatpush1.msra.mxu0 0.0
    %1349 = vmatprep.subr.mxu0 0.0
    %1350 = vmatpush1.msra.mxu0 0.0
    %1351 = vmatprep.subr.mxu0 0.0
    %1352 = vmatpush1.msra.mxu0 0.0
    %1353 = vmatprep.subr.mxu0 0.0
    %1354 = vmatpush1.msra.mxu0 0.0
    %1355 = vmatprep.subr.mxu0 0.0
    %1356 = vmatpush1.msra.mxu0 0.0
    %1357 = vmatprep.subr.mxu0 0.0
    %1358 = vmatpush1.msra.mxu0 0.0
    %1359 = vmatprep.subr.mxu0 0.0
    %1360 = vmatpush1.msra.mxu0 0.0
    %1361 = vmatprep.subr.mxu0 0.0
    %1362 = vmatpush1.msra.mxu0 0.0
    %1363 = vmatprep.subr.mxu0 0.0
    %1364 = vmatpush1.msra.mxu0 0.0
    %1365 = vmatprep.subr.mxu0 0.0
    %1366 = vmatpush1.msra.mxu0 0.0
    %1367 = vmatprep.subr.mxu0 0.0
    %1368 = vmatpush1.msra.mxu0 0.0
    %1369 = vmatprep.subr.mxu0 0.0
    %1370 = vmatpush1.msra.mxu0 %v1339
    %1371 = vmatprep.subr.mxu0 0.0
    %1372 = vmatpush1.msra.mxu0 %v1338
    %1373 = vmatprep.subr.mxu0 0.0
    %1374 = vmatpush1.msra.mxu0 %v1337
    %1375 = vmatprep.subr.mxu0 0.0
    %1376 = vmatpush1.msra.mxu0 %v1336
    %1377 = vmatprep.subr.mxu0 0.0
    %1378 = vmatpush2.msra.mxu0 0.0
    %1379 = vmatprep.subr.mxu0 0.0
    %1380 = vmatpush2.msra.mxu0 0.0
    %1381 = vmatprep.subr.mxu0 0.0
    %1382 = vmatpush2.msra.mxu0 0.0
    %1383 = vmatprep.subr.mxu0 0.0
    %1384 = vmatpush2.msra.mxu0 0.0
    %1385 = vmatprep.subr.mxu0 0.0
    %1386 = vmatpush2.msra.mxu0 0.0
    %1387 = vmatprep.subr.mxu0 0.0
    %1388 = vmatpush2.msra.mxu0 0.0
    %1389 = vmatprep.subr.mxu0 0.0
    %1390 = vmatpush2.msra.mxu0 0.0
    %1391 = vmatprep.subr.mxu0 0.0
    %1392 = vmatpush2.msra.mxu0 0.0
    %1393 = vmatprep.subr.mxu0 0.0
    %1394 = vmatpush2.msra.mxu0 0.0
    %1395 = vmatprep.subr.mxu0 0.0
    %1396 = vmatpush2.msra.mxu0 0.0
    %1397 = vmatprep.subr.mxu0 0.0
    %1398 = vmatpush2.msra.mxu0 0.0
    %1399 = vmatprep.subr.mxu0 0.0
    %1400 = vmatpush2.msra.mxu0 0.0
    %1401 = vmatprep.subr.mxu0 0.0
    %1402 = vmatpush2.msra.mxu0 0.0
    %1403 = vmatprep.subr.mxu0 0.0
    %1404 = vmatpush2.msra.mxu0 0.0
    %1405 = vmatprep.subr.mxu0 0.0
    %1406 = vmatpush2.msra.mxu0 0.0
    %1407 = vmatprep.subr.mxu0 0.0
    %1408 = vmatpush2.msra.mxu0 0.0
    %1409 = vmatprep.mubr.f32.mxu0 0.0
    %1410 = vmatmul.mubr.f32.gmra.mxu0 %v1172
    %v1411 = vpop.f32.mrf.mxu0
    %v1412 = vadd.f32 %v1344, %v1411
    %v1413 = vpop.f32.mrf.mxu0
    %1414 = vmatprep.mubr.f32.mxu0 0.0
    %1415 = vmatmul.mubr.f32.gmra.mxu0 %v1175
    %v1416 = vpop.f32.mrf.mxu0
    %v1417 = vadd.f32 %v1344, %v1416
    %v1418 = vpop.f32.mrf.mxu0
    %1419 = vdwg.mxu0
    %v1420 = vmul.f32 %v1244, %v1328
    %v1421 = vmul.f32 %v1249, %v1333
    %1422 = vmatprep.subr.mxu0 0.0
    %1423 = vmatpush1.msra.mxu0 %v54
    %1424 = vmatprep.subr.mxu0 0.0
    %1425 = vmatpush1.msra.mxu0 %v53
    %1426 = vmatprep.subr.mxu0 0.0
    %1427 = vmatpush1.msra.mxu0 %v52
    %1428 = vmatprep.subr.mxu0 0.0
    %1429 = vmatpush1.msra.mxu0 %v51
    %1430 = vmatprep.subr.mxu0 0.0
    %1431 = vmatpush1.msra.mxu0 %v50
    %1432 = vmatprep.subr.mxu0 0.0
    %1433 = vmatpush1.msra.mxu0 %v49
    %1434 = vmatprep.subr.mxu0 0.0
    %1435 = vmatpush1.msra.mxu0 %v48
    %1436 = vmatprep.subr.mxu0 0.0
    %1437 = vmatpush1.msra.mxu0 %v47
    %1438 = vmatprep.subr.mxu0 0.0
    %1439 = vmatpush1.msra.mxu0 %v46
    %1440 = vmatprep.subr.mxu0 0.0
    %1441 = vmatpush1.msra.mxu0 %v45
    %1442 = vmatprep.subr.mxu0 0.0
    %1443 = vmatpush1.msra.mxu0 %v44
    %1444 = vmatprep.subr.mxu0 0.0
    %1445 = vmatpush1.msra.mxu0 %v43
    %1446 = vmatprep.subr.mxu0 0.0
    %1447 = vmatpush1.msra.mxu0 %v42
    %1448 = vmatprep.subr.mxu0 0.0
    %1449 = vmatpush1.msra.mxu0 %v41
    %1450 = vmatprep.subr.mxu0 0.0
    %1451 = vmatpush1.msra.mxu0 %v40
    %1452 = vmatprep.subr.mxu0 0.0
    %1453 = vmatpush1.msra.mxu0 %v39
    %1454 = vmatprep.subr.mxu0 0.0
    %1455 = vmatpush2.msra.mxu0 0.0
    %1456 = vmatprep.subr.mxu0 0.0
    %1457 = vmatpush2.msra.mxu0 0.0
    %1458 = vmatprep.subr.mxu0 0.0
    %1459 = vmatpush2.msra.mxu0 0.0
    %1460 = vmatprep.subr.mxu0 0.0
    %1461 = vmatpush2.msra.mxu0 0.0
    %1462 = vmatprep.subr.mxu0 0.0
    %1463 = vmatpush2.msra.mxu0 0.0
    %1464 = vmatprep.subr.mxu0 0.0
    %1465 = vmatpush2.msra.mxu0 0.0
    %1466 = vmatprep.subr.mxu0 0.0
    %1467 = vmatpush2.msra.mxu0 0.0
    %1468 = vmatprep.subr.mxu0 0.0
    %1469 = vmatpush2.msra.mxu0 0.0
    %1470 = vmatprep.subr.mxu0 0.0
    %1471 = vmatpush2.msra.mxu0 0.0
    %1472 = vmatprep.subr.mxu0 0.0
    %1473 = vmatpush2.msra.mxu0 0.0
    %1474 = vmatprep.subr.mxu0 0.0
    %1475 = vmatpush2.msra.mxu0 0.0
    %1476 = vmatprep.subr.mxu0 0.0
    %1477 = vmatpush2.msra.mxu0 0.0
    %1478 = vmatprep.subr.mxu0 0.0
    %1479 = vmatpush2.msra.mxu0 0.0
    %1480 = vmatprep.subr.mxu0 0.0
    %1481 = vmatpush2.msra.mxu0 0.0
    %1482 = vmatprep.subr.mxu0 0.0
    %1483 = vmatpush2.msra.mxu0 0.0
    %1484 = vmatprep.subr.mxu0 0.0
    %1485 = vmatpush2.msra.mxu0 0.0
    %1486 = vmatprep.mubr.f32.mxu0 0.0
    %1487 = vmatmul.mubr.f32.gmra.mxu0 %v1420
    %v1488 = vpop.f32.mrf.mxu0
    %v1489 = vadd.f32 0.0, %v1488
    %v1490 = vpop.f32.mrf.mxu0
    %1491 = vmatprep.mubr.f32.mxu0 0.0
    %1492 = vmatmul.mubr.f32.gmra.mxu0 %v1421
    %v1493 = vpop.f32.mrf.mxu0
    %v1494 = vadd.f32 0.0, %v1493
    %v1495 = vpop.f32.mrf.mxu0
    %1496 = vdwg.mxu0
    %v1497 = vsel %vm421, %v1489, -inf
    %1498 = vmax.xlane.f32.xlu0 %v1497
    %v1499 = vpop.xlane.xlu0 %1498
    %v1500 = vsel %vm421, %v1494, -inf
    %1501 = vmax.xlane.f32.xlu0 %v1500
    %v1502 = vpop.xlane.xlu0 %1501
    %v1503 = vsub.f32 %v1489, %v1499
    %v1504 = vsub.f32 %v1494, %v1502
    %v1505 = vmul.f32 %v1503, 1.442695
    %v1506 = vpow.pop %v1505
    %v1507 = vmul.f32 %v1504, 1.442695
    %v1508 = vpow.pop %v1507
    %v1510 = vsel %vm421, %v1506, 0
    %v1513 = vsel %vm421, %v1508, 0
    %1515 = vmatprep.subr.mxu0 0.0
    %1516 = vmatpush1.msra.mxu0 0.0
    %1517 = vmatprep.subr.mxu0 0.0
    %1518 = vmatpush1.msra.mxu0 0.0
    %1519 = vmatprep.subr.mxu0 0.0
    %1520 = vmatpush1.msra.mxu0 0.0
    %1521 = vmatprep.subr.mxu0 0.0
    %1522 = vmatpush1.msra.mxu0 0.0
    %1523 = vmatprep.subr.mxu0 0.0
    %1524 = vmatpush1.msra.mxu0 0.0
    %1525 = vmatprep.subr.mxu0 0.0
    %1526 = vmatpush1.msra.mxu0 0.0
    %1527 = vmatprep.subr.mxu0 0.0
    %1528 = vmatpush1.msra.mxu0 0.0
    %1529 = vmatprep.subr.mxu0 0.0
    %1530 = vmatpush1.msra.mxu0 0.0
    %1531 = vmatprep.subr.mxu0 0.0
    %1532 = vmatpush1.msra.mxu0 0.0
    %1533 = vmatprep.subr.mxu0 0.0
    %1534 = vmatpush1.msra.mxu0 0.0
    %1535 = vmatprep.subr.mxu0 0.0
    %1536 = vmatpush1.msra.mxu0 0.0
    %1537 = vmatprep.subr.mxu0 0.0
    %1538 = vmatpush1.msra.mxu0 0.0
    %1539 = vmatprep.subr.mxu0 0.0
    %1540 = vmatpush1.msra.mxu0 0.0
    %1541 = vmatprep.subr.mxu0 0.0
    %1542 = vmatpush1.msra.mxu0 0.0
    %1543 = vmatprep.subr.mxu0 0.0
    %1544 = vmatpush1.msra.mxu0 %v56
    %1545 = vmatprep.subr.mxu0 0.0
    %1546 = vmatpush1.msra.mxu0 %v55
    %1547 = vmatprep.subr.mxu0 0.0
    %1548 = vmatpush2.msra.mxu0 0.0
    %1549 = vmatprep.subr.mxu0 0.0
    %1550 = vmatpush2.msra.mxu0 0.0
    %1551 = vmatprep.subr.mxu0 0.0
    %1552 = vmatpush2.msra.mxu0 0.0
    %1553 = vmatprep.subr.mxu0 0.0
    %1554 = vmatpush2.msra.mxu0 0.0
    %1555 = vmatprep.subr.mxu0 0.0
    %1556 = vmatpush2.msra.mxu0 0.0
    %1557 = vmatprep.subr.mxu0 0.0
    %1558 = vmatpush2.msra.mxu0 0.0
    %1559 = vmatprep.subr.mxu0 0.0
    %1560 = vmatpush2.msra.mxu0 0.0
    %1561 = vmatprep.subr.mxu0 0.0
    %1562 = vmatpush2.msra.mxu0 0.0
    %1563 = vmatprep.subr.mxu0 0.0
    %1564 = vmatpush2.msra.mxu0 0.0
    %1565 = vmatprep.subr.mxu0 0.0
    %1566 = vmatpush2.msra.mxu0 0.0
    %1567 = vmatprep.subr.mxu0 0.0
    %1568 = vmatpush2.msra.mxu0 0.0
    %1569 = vmatprep.subr.mxu0 0.0
    %1570 = vmatpush2.msra.mxu0 0.0
    %1571 = vmatprep.subr.mxu0 0.0
    %1572 = vmatpush2.msra.mxu0 0.0
    %1573 = vmatprep.subr.mxu0 0.0
    %1574 = vmatpush2.msra.mxu0 0.0
    %1575 = vmatprep.subr.mxu0 0.0
    %1576 = vmatpush2.msra.mxu0 0.0
    %1577 = vmatprep.subr.mxu0 0.0
    %1578 = vmatpush2.msra.mxu0 0.0
    %1579 = vmatprep.mubr.f32.mxu0 0.0
    %1580 = vmatmul.mubr.f32.gmra.mxu0 %v1510
    %v1581 = vpop.f32.mrf.mxu0
    %v1582 = vadd.f32 0.0, %v1581
    %v1583 = vpop.f32.mrf.mxu0
    %1584 = vmatprep.mubr.f32.mxu0 0.0
    %1585 = vmatmul.mubr.f32.gmra.mxu0 %v1513
    %v1586 = vpop.f32.mrf.mxu0
    %v1587 = vadd.f32 0.0, %v1586
    %v1588 = vpop.f32.mrf.mxu0
    %1589 = vdwg.mxu0
    %v1590 = vrcp.pop %v1582
    %v1591 = vmul.f32 %v1506, %v1590
    %v1592 = vrcp.pop %v1587
    %v1593 = vmul.f32 %v1508, %v1592
    %v1595 = vsel %vm421, %v1591, 0
    %v1598 = vsel %vm421, %v1593, 0
    %1600 = vmatprep.subr.mxu0 0.0
    %1601 = vmatpush1.msra.mxu0 0.0
    %1602 = vmatprep.subr.mxu0 0.0
    %1603 = vmatpush1.msra.mxu0 0.0
    %1604 = vmatprep.subr.mxu0 0.0
    %1605 = vmatpush1.msra.mxu0 0.0
    %1606 = vmatprep.subr.mxu0 0.0
    %1607 = vmatpush1.msra.mxu0 0.0
    %1608 = vmatprep.subr.mxu0 0.0
    %1609 = vmatpush1.msra.mxu0 0.0
    %1610 = vmatprep.subr.mxu0 0.0
    %1611 = vmatpush1.msra.mxu0 0.0
    %1612 = vmatprep.subr.mxu0 0.0
    %1613 = vmatpush1.msra.mxu0 0.0
    %1614 = vmatprep.subr.mxu0 0.0
    %1615 = vmatpush1.msra.mxu0 0.0
    %1616 = vmatprep.subr.mxu0 0.0
    %1617 = vmatpush1.msra.mxu0 0.0
    %1618 = vmatprep.subr.mxu0 0.0
    %1619 = vmatpush1.msra.mxu0 0.0
    %1620 = vmatprep.subr.mxu0 0.0
    %1621 = vmatpush1.msra.mxu0 0.0
    %1622 = vmatprep.subr.mxu0 0.0
    %1623 = vmatpush1.msra.mxu0 0.0
    %1624 = vmatprep.subr.mxu0 0.0
    %1625 = vmatpush1.msra.mxu0 0.0
    %1626 = vmatprep.subr.mxu0 0.0
    %1627 = vmatpush1.msra.mxu0 0.0
    %1628 = vmatprep.subr.mxu0 0.0
    %1629 = vmatpush1.msra.mxu0 %v58
    %1630 = vmatprep.subr.mxu0 0.0
    %1631 = vmatpush1.msra.mxu0 %v57
    %1632 = vmatprep.subr.mxu0 0.0
    %1633 = vmatpush2.msra.mxu0 0.0
    %1634 = vmatprep.subr.mxu0 0.0
    %1635 = vmatpush2.msra.mxu0 0.0
    %1636 = vmatprep.subr.mxu0 0.0
    %1637 = vmatpush2.msra.mxu0 0.0
    %1638 = vmatprep.subr.mxu0 0.0
    %1639 = vmatpush2.msra.mxu0 0.0
    %1640 = vmatprep.subr.mxu0 0.0
    %1641 = vmatpush2.msra.mxu0 0.0
    %1642 = vmatprep.subr.mxu0 0.0
    %1643 = vmatpush2.msra.mxu0 0.0
    %1644 = vmatprep.subr.mxu0 0.0
    %1645 = vmatpush2.msra.mxu0 0.0
    %1646 = vmatprep.subr.mxu0 0.0
    %1647 = vmatpush2.msra.mxu0 0.0
    %1648 = vmatprep.subr.mxu0 0.0
    %1649 = vmatpush2.msra.mxu0 0.0
    %1650 = vmatprep.subr.mxu0 0.0
    %1651 = vmatpush2.msra.mxu0 0.0
    %1652 = vmatprep.subr.mxu0 0.0
    %1653 = vmatpush2.msra.mxu0 0.0
    %1654 = vmatprep.subr.mxu0 0.0
    %1655 = vmatpush2.msra.mxu0 0.0
    %1656 = vmatprep.subr.mxu0 0.0
    %1657 = vmatpush2.msra.mxu0 0.0
    %1658 = vmatprep.subr.mxu0 0.0
    %1659 = vmatpush2.msra.mxu0 0.0
    %1660 = vmatprep.subr.mxu0 0.0
    %1661 = vmatpush2.msra.mxu0 0.0
    %1662 = vmatprep.subr.mxu0 0.0
    %1663 = vmatpush2.msra.mxu0 0.0
    %1664 = vmatprep.mubr.f32.mxu0 0.0
    %1665 = vmatmul.mubr.f32.gmra.mxu0 %v1595
    %v1666 = vpop.f32.mrf.mxu0
    %v1667 = vadd.f32 0.0, %v1666
    %v1668 = vpop.f32.mrf.mxu0
    %1669 = vmatprep.mubr.f32.mxu0 0.0
    %1670 = vmatmul.mubr.f32.gmra.mxu0 %v1598
    %v1671 = vpop.f32.mrf.mxu0
    %v1672 = vadd.f32 0.0, %v1671
    %v1673 = vpop.f32.mrf.mxu0
    %1674 = vdwg.mxu0
    %v1675 = vmul.f32 %v1667, %v1412
    %v1676 = vmul.f32 %v1672, %v1417
    %1677 = vmatprep.subr.mxu0 0.0
    %1678 = vmatpush1.msra.mxu0 %v74
    %1679 = vmatprep.subr.mxu0 0.0
    %1680 = vmatpush1.msra.mxu0 %v73
    %1681 = vmatprep.subr.mxu0 0.0
    %1682 = vmatpush1.msra.mxu0 %v72
    %1683 = vmatprep.subr.mxu0 0.0
    %1684 = vmatpush1.msra.mxu0 %v71
    %1685 = vmatprep.subr.mxu0 0.0
    %1686 = vmatpush1.msra.mxu0 %v70
    %1687 = vmatprep.subr.mxu0 0.0
    %1688 = vmatpush1.msra.mxu0 %v69
    %1689 = vmatprep.subr.mxu0 0.0
    %1690 = vmatpush1.msra.mxu0 %v68
    %1691 = vmatprep.subr.mxu0 0.0
    %1692 = vmatpush1.msra.mxu0 %v67
    %1693 = vmatprep.subr.mxu0 0.0
    %1694 = vmatpush1.msra.mxu0 %v66
    %1695 = vmatprep.subr.mxu0 0.0
    %1696 = vmatpush1.msra.mxu0 %v65
    %1697 = vmatprep.subr.mxu0 0.0
    %1698 = vmatpush1.msra.mxu0 %v64
    %1699 = vmatprep.subr.mxu0 0.0
    %1700 = vmatpush1.msra.mxu0 %v63
    %1701 = vmatprep.subr.mxu0 0.0
    %1702 = vmatpush1.msra.mxu0 %v62
    %1703 = vmatprep.subr.mxu0 0.0
    %1704 = vmatpush1.msra.mxu0 %v61
    %1705 = vmatprep.subr.mxu0 0.0
    %1706 = vmatpush1.msra.mxu0 %v60
    %1707 = vmatprep.subr.mxu0 0.0
    %1708 = vmatpush1.msra.mxu0 %v59
    %1709 = vmatprep.subr.mxu0 0.0
    %1710 = vmatpush2.msra.mxu0 0.0
    %1711 = vmatprep.subr.mxu0 0.0
    %1712 = vmatpush2.msra.mxu0 0.0
    %1713 = vmatprep.subr.mxu0 0.0
    %1714 = vmatpush2.msra.mxu0 0.0
    %1715 = vmatprep.subr.mxu0 0.0
    %1716 = vmatpush2.msra.mxu0 0.0
    %1717 = vmatprep.subr.mxu0 0.0
    %1718 = vmatpush2.msra.mxu0 0.0
    %1719 = vmatprep.subr.mxu0 0.0
    %1720 = vmatpush2.msra.mxu0 0.0
    %1721 = vmatprep.subr.mxu0 0.0
    %1722 = vmatpush2.msra.mxu0 0.0
    %1723 = vmatprep.subr.mxu0 0.0
    %1724 = vmatpush2.msra.mxu0 0.0
    %1725 = vmatprep.subr.mxu0 0.0
    %1726 = vmatpush2.msra.mxu0 0.0
    %1727 = vmatprep.subr.mxu0 0.0
    %1728 = vmatpush2.msra.mxu0 0.0
    %1729 = vmatprep.subr.mxu0 0.0
    %1730 = vmatpush2.msra.mxu0 0.0
    %1731 = vmatprep.subr.mxu0 0.0
    %1732 = vmatpush2.msra.mxu0 0.0
    %1733 = vmatprep.subr.mxu0 0.0
    %1734 = vmatpush2.msra.mxu0 0.0
    %1735 = vmatprep.subr.mxu0 0.0
    %1736 = vmatpush2.msra.mxu0 0.0
    %1737 = vmatprep.subr.mxu0 0.0
    %1738 = vmatpush2.msra.mxu0 0.0
    %1739 = vmatprep.subr.mxu0 0.0
    %1740 = vmatpush2.msra.mxu0 0.0
    %1741 = vmatprep.mubr.f32.mxu0 0.0
    %1742 = vmatmul.mubr.f32.gmra.mxu0 %v1675
    %v1743 = vpop.f32.mrf.mxu0
    %v1744 = vadd.f32 0.0, %v1743
    %v1745 = vpop.f32.mrf.mxu0
    %1746 = vmatprep.mubr.f32.mxu0 0.0
    %1747 = vmatmul.mubr.f32.gmra.mxu0 %v1676
    %v1748 = vpop.f32.mrf.mxu0
    %v1749 = vadd.f32 0.0, %v1748
    %v1750 = vpop.f32.mrf.mxu0
    %1751 = vdwg.mxu0
    %1752 = vst.msk [vmem:[#allocation2] sm:$0xff] %vm677, %v1744
    %1753 = vst.msk [vmem:[#allocation2 + $0x8] sm:$0xff] %vm677, %v1749
    %1756 = vrot.lane.b32.xlu0 %v1744, 120
    %v1757 = vpop.permute.xlu0 %1756
    %1758 = vrot.lane.b32.xlu0 %v1749, 120
    %v1759 = vpop.permute.xlu0 %1758
    %1762 = vst.msk [vmem:[#allocation2 + $0x10] sm:$0xff] %vm677, %v1757
    %1763 = vst.msk [vmem:[#allocation2 + $0x18] sm:$0xff] %vm677, %v1759
    %1764 = vrot.lane.b32.xlu0 %v1744, 112
    %v1765 = vpop.permute.xlu0 %1764
    %1766 = vrot.lane.b32.xlu0 %v1749, 112
    %v1767 = vpop.permute.xlu0 %1766
    %1770 = vst.msk [vmem:[#allocation2 + $0x20] sm:$0xff] %vm677, %v1765
    %1771 = vst.msk [vmem:[#allocation2 + $0x28] sm:$0xff] %vm677, %v1767
    %1772 = vrot.lane.b32.xlu0 %v1744, 104
    %v1773 = vpop.permute.xlu0 %1772
    %1774 = vrot.lane.b32.xlu0 %v1749, 104
    %v1775 = vpop.permute.xlu0 %1774
    %1778 = vst.msk [vmem:[#allocation2 + $0x30] sm:$0xff] %vm677, %v1773
    %1779 = vst.msk [vmem:[#allocation2 + $0x38] sm:$0xff] %vm677, %v1775
    %v1780 = vld [vmem:[#allocation2] sm:$0xff]
    %v1781 = vld [vmem:[#allocation2 + $0x8] sm:$0xff]
    %v1782 = vld [vmem:[#allocation2 + $0x10] sm:$0xff]
    %v1783 = vld [vmem:[#allocation2 + $0x18] sm:$0xff]
    %v1784 = vld [vmem:[#allocation2 + $0x20] sm:$0xff]
    %v1785 = vld [vmem:[#allocation2 + $0x28] sm:$0xff]
    %v1786 = vld [vmem:[#allocation2 + $0x30] sm:$0xff]
    %v1787 = vld [vmem:[#allocation2 + $0x38] sm:$0xff]
    %1788 = vmatprep.subr.mxu0 0.0
    %1789 = vmatpush1.msra.mxu0 0.0
    %1790 = vmatprep.subr.mxu0 0.0
    %1791 = vmatpush1.msra.mxu0 0.0
    %1792 = vmatprep.subr.mxu0 0.0
    %1793 = vmatpush1.msra.mxu0 0.0
    %1794 = vmatprep.subr.mxu0 0.0
    %1795 = vmatpush1.msra.mxu0 0.0
    %1796 = vmatprep.subr.mxu0 0.0
    %1797 = vmatpush1.msra.mxu0 0.0
    %1798 = vmatprep.subr.mxu0 0.0
    %1799 = vmatpush1.msra.mxu0 0.0
    %1800 = vmatprep.subr.mxu0 0.0
    %1801 = vmatpush1.msra.mxu0 0.0
    %1802 = vmatprep.subr.mxu0 0.0
    %1803 = vmatpush1.msra.mxu0 0.0
    %1804 = vmatprep.subr.mxu0 0.0
    %1805 = vmatpush1.msra.mxu0 %v1787
    %1806 = vmatprep.subr.mxu0 0.0
    %1807 = vmatpush1.msra.mxu0 %v1786
    %1808 = vmatprep.subr.mxu0 0.0
    %1809 = vmatpush1.msra.mxu0 %v1785
    %1810 = vmatprep.subr.mxu0 0.0
    %1811 = vmatpush1.msra.mxu0 %v1784
    %1812 = vmatprep.subr.mxu0 0.0
    %1813 = vmatpush1.msra.mxu0 %v1783
    %1814 = vmatprep.subr.mxu0 0.0
    %1815 = vmatpush1.msra.mxu0 %v1782
    %1816 = vmatprep.subr.mxu0 0.0
    %1817 = vmatpush1.msra.mxu0 %v1781
    %1818 = vmatprep.subr.mxu0 0.0
    %1819 = vmatpush1.msra.mxu0 %v1780
    %1820 = vmatprep.subr.mxu0 0.0
    %1821 = vmatpush2.msra.mxu0 0.0
    %1822 = vmatprep.subr.mxu0 0.0
    %1823 = vmatpush2.msra.mxu0 0.0
    %1824 = vmatprep.subr.mxu0 0.0
    %1825 = vmatpush2.msra.mxu0 0.0
    %1826 = vmatprep.subr.mxu0 0.0
    %1827 = vmatpush2.msra.mxu0 0.0
    %1828 = vmatprep.subr.mxu0 0.0
    %1829 = vmatpush2.msra.mxu0 0.0
    %1830 = vmatprep.subr.mxu0 0.0
    %1831 = vmatpush2.msra.mxu0 0.0
    %1832 = vmatprep.subr.mxu0 0.0
    %1833 = vmatpush2.msra.mxu0 0.0
    %1834 = vmatprep.subr.mxu0 0.0
    %1835 = vmatpush2.msra.mxu0 0.0
    %1836 = vmatprep.subr.mxu0 0.0
    %1837 = vmatpush2.msra.mxu0 0.0
    %1838 = vmatprep.subr.mxu0 0.0
    %1839 = vmatpush2.msra.mxu0 0.0
    %1840 = vmatprep.subr.mxu0 0.0
    %1841 = vmatpush2.msra.mxu0 0.0
    %1842 = vmatprep.subr.mxu0 0.0
    %1843 = vmatpush2.msra.mxu0 0.0
    %1844 = vmatprep.subr.mxu0 0.0
    %1845 = vmatpush2.msra.mxu0 0.0
    %1846 = vmatprep.subr.mxu0 0.0
    %1847 = vmatpush2.msra.mxu0 0.0
    %1848 = vmatprep.subr.mxu0 0.0
    %1849 = vmatpush2.msra.mxu0 0.0
    %1850 = vmatprep.subr.mxu0 0.0
    %1851 = vmatpush2.msra.mxu0 0.0
    %1852 = vmatprep.mubr.f32.mxu0 0.0
    %1853 = vmatmul.mubr.f32.gmra.mxu0 %v716
    %v1854 = vpop.f32.mrf.mxu0
    %v1855 = vadd.f32 0.0, %v1854
    %v1856 = vpop.f32.mrf.mxu0
    %1857 = vmatprep.mubr.f32.mxu0 0.0
    %1858 = vmatmul.mubr.f32.gmra.mxu0 %v719
    %v1859 = vpop.f32.mrf.mxu0
    %v1860 = vadd.f32 0.0, %v1859
    %v1861 = vpop.f32.mrf.mxu0
    %1862 = vmatprep.mubr.f32.mxu0 0.0
    %1863 = vmatmul.mubr.f32.gmra.mxu0 %v722
    %v1864 = vpop.f32.mrf.mxu0
    %v1865 = vadd.f32 0.0, %v1864
    %v1866 = vpop.f32.mrf.mxu0
    %1867 = vmatprep.mubr.f32.mxu0 0.0
    %1868 = vmatmul.mubr.f32.gmra.mxu0 %v725
    %v1869 = vpop.f32.mrf.mxu0
    %v1870 = vadd.f32 0.0, %v1869
    %v1871 = vpop.f32.mrf.mxu0
    %1872 = vmatprep.mubr.f32.mxu0 0.0
    %1873 = vmatmul.mubr.f32.gmra.mxu0 %v728
    %v1874 = vpop.f32.mrf.mxu0
    %v1875 = vadd.f32 0.0, %v1874
    %v1876 = vpop.f32.mrf.mxu0
    %1877 = vmatprep.mubr.f32.mxu0 0.0
    %1878 = vmatmul.mubr.f32.gmra.mxu0 %v731
    %v1879 = vpop.f32.mrf.mxu0
    %v1880 = vadd.f32 0.0, %v1879
    %v1881 = vpop.f32.mrf.mxu0
    %1882 = vmatprep.mubr.f32.mxu0 0.0
    %1883 = vmatmul.mubr.f32.gmra.mxu0 %v734
    %v1884 = vpop.f32.mrf.mxu0
    %v1885 = vadd.f32 0.0, %v1884
    %v1886 = vpop.f32.mrf.mxu0
    %1887 = vmatprep.mubr.f32.mxu0 0.0
    %1888 = vmatmul.mubr.f32.gmra.mxu0 %v737
    %v1889 = vpop.f32.mrf.mxu0
    %v1890 = vadd.f32 0.0, %v1889
    %v1891 = vpop.f32.mrf.mxu0
    %1892 = vdwg.mxu0
    %1893 = vst.msk [vmem:[#allocation3] sm:$0xff] %vm677, %v1855
    %1894 = vst.msk [vmem:[#allocation3 + $0x8] sm:$0xff] %vm677, %v1860
    %1897 = vrot.lane.b32.xlu0 %v1865, 8
    %v1898 = vpop.permute.xlu0 %1897
    %1899 = vrot.lane.b32.xlu0 %v1870, 8
    %v1900 = vpop.permute.xlu0 %1899
    %1903 = vst.msk [vmem:[#allocation3] sm:$0xff] %vm854, %v1898
    %1904 = vst.msk [vmem:[#allocation3 + $0x8] sm:$0xff] %vm854, %v1900
    %1907 = vrot.lane.b32.xlu0 %v1875, 16
    %v1908 = vpop.permute.xlu0 %1907
    %1909 = vrot.lane.b32.xlu0 %v1880, 16
    %v1910 = vpop.permute.xlu0 %1909
    %1913 = vst.msk [vmem:[#allocation3] sm:$0xff] %vm865, %v1908
    %1914 = vst.msk [vmem:[#allocation3 + $0x8] sm:$0xff] %vm865, %v1910
    %1917 = vrot.lane.b32.xlu0 %v1885, 24
    %v1918 = vpop.permute.xlu0 %1917
    %1919 = vrot.lane.b32.xlu0 %v1890, 24
    %v1920 = vpop.permute.xlu0 %1919
    %1923 = vst.msk [vmem:[#allocation3] sm:$0xff] %vm876, %v1918
    %1924 = vst.msk [vmem:[#allocation3 + $0x8] sm:$0xff] %vm876, %v1920
    %v1925 = vld [vmem:[#allocation3] sm:$0xff]
    %v1926 = vld [vmem:[#allocation3 + $0x8] sm:$0xff]
    %v1927 = vadd.f32 %v1160, %v1925
    %v1928 = vadd.f32 %v1161, %v1926
    %v1929 = vld [vmem:[#allocation6 + $0x36d] sm:$0x1]
    %v1930 = vld [vmem:[#allocation6 + $0x36e] sm:$0x1]
    %v1931 = vsel %vm94, %v1927, 0.0
    %1932 = vadd.xlane.f32.xlu0 %v1931
    %v1933 = vpop.xlane.xlu0 %1932
    %v1934 = vsel %vm94, %v1928, 0.0
    %1935 = vadd.xlane.f32.xlu0 %v1934
    %v1936 = vpop.xlane.xlu0 %1935
    %v1937 = vmul.f32 %v1933, %v891
    %v1938 = vmul.f32 %v1936, %v891
    %v1939 = vsub.f32 %v1927, %v1937
    %v1940 = vsub.f32 %v1928, %v1938
    %v1941 = vmul.f32 %v1939, %v1939
    %v1942 = vmul.f32 %v1940, %v1940
    %v1943 = vsel %vm94, %v1941, 0.0
    %1944 = vadd.xlane.f32.xlu0 %v1943
    %v1945 = vpop.xlane.xlu0 %1944
    %v1946 = vsel %vm94, %v1942, 0.0
    %1947 = vadd.xlane.f32.xlu0 %v1946
    %v1948 = vpop.xlane.xlu0 %1947
    %v1949 = vmul.f32 %v1945, %v891
    %v1950 = vmul.f32 %v1948, %v891
    %v1951 = vadd.f32 %v1949, 1e-05
    %v1952 = vadd.f32 %v1950, 1e-05
    %v1953 = vrsqrt.pop %v1951
    %v1954 = vrsqrt.pop %v1952
    %v1955 = vmul.f32 %v1939, %v1953
    %v1956 = vmul.f32 %v1940, %v1954
    %v1957 = vlaneseq
    %v1958 = vshrl.u32 %v1957, 7
    %v1959 = vsub.s32 0, %v1958
    %v1960 = vrot.slane %v1929, %v1959
    %v1961 = vmul.f32 %v1955, %v1960
    %v1962 = vmul.f32 %v1956, %v1960
    %v1963 = vlaneseq
    %v1964 = vshrl.u32 %v1963, 7
    %v1965 = vsub.s32 0, %v1964
    %v1966 = vrot.slane %v1930, %v1965
    %v1967 = vadd.f32 %v1961, %v1966
    %v1968 = vadd.f32 %v1962, %v1966
    %v1969 = vld [vmem:[#allocation6 + $0x2c0] sm:$0xff]
    %v1970 = vld [vmem:[#allocation6 + $0x2c8] sm:$0xff]
    %v1971 = vld [vmem:[#allocation6 + $0x2d0] sm:$0xff]
    %v1972 = vld [vmem:[#allocation6 + $0x2d8] sm:$0xff]
    %v1973 = vld [vmem:[#allocation6 + $0x36c] sm:$0x1]
    %v1974 = vlaneseq
    %v1975 = vshrl.u32 %v1974, 7
    %v1976 = vsub.s32 0, %v1975
    %v1977 = vrot.slane %v1973, %v1976
    %v1979 = vsel %vm94, %v1967, 0
    %v1982 = vsel %vm94, %v1968, 0
    %1984 = vmatprep.subr.mxu0 0.0
    %1985 = vmatpush1.msra.mxu0 0.0
    %1986 = vmatprep.subr.mxu0 0.0
    %1987 = vmatpush1.msra.mxu0 0.0
    %1988 = vmatprep.subr.mxu0 0.0
    %1989 = vmatpush1.msra.mxu0 0.0
    %1990 = vmatprep.subr.mxu0 0.0
    %1991 = vmatpush1.msra.mxu0 0.0
    %1992 = vmatprep.subr.mxu0 0.0
    %1993 = vmatpush1.msra.mxu0 0.0
    %1994 = vmatprep.subr.mxu0 0.0
    %1995 = vmatpush1.msra.mxu0 0.0
    %1996 = vmatprep.subr.mxu0 0.0
    %1997 = vmatpush1.msra.mxu0 0.0
    %1998 = vmatprep.subr.mxu0 0.0
    %1999 = vmatpush1.msra.mxu0 0.0
    %2000 = vmatprep.subr.mxu0 0.0
    %2001 = vmatpush1.msra.mxu0 0.0
    %2002 = vmatprep.subr.mxu0 0.0
    %2003 = vmatpush1.msra.mxu0 0.0
    %2004 = vmatprep.subr.mxu0 0.0
    %2005 = vmatpush1.msra.mxu0 0.0
    %2006 = vmatprep.subr.mxu0 0.0
    %2007 = vmatpush1.msra.mxu0 0.0
    %2008 = vmatprep.subr.mxu0 0.0
    %2009 = vmatpush1.msra.mxu0 %v1972
    %2010 = vmatprep.subr.mxu0 0.0
    %2011 = vmatpush1.msra.mxu0 %v1971
    %2012 = vmatprep.subr.mxu0 0.0
    %2013 = vmatpush1.msra.mxu0 %v1970
    %2014 = vmatprep.subr.mxu0 0.0
    %2015 = vmatpush1.msra.mxu0 %v1969
    %2016 = vmatprep.subr.mxu0 0.0
    %2017 = vmatpush2.msra.mxu0 0.0
    %2018 = vmatprep.subr.mxu0 0.0
    %2019 = vmatpush2.msra.mxu0 0.0
    %2020 = vmatprep.subr.mxu0 0.0
    %2021 = vmatpush2.msra.mxu0 0.0
    %2022 = vmatprep.subr.mxu0 0.0
    %2023 = vmatpush2.msra.mxu0 0.0
    %2024 = vmatprep.subr.mxu0 0.0
    %2025 = vmatpush2.msra.mxu0 0.0
    %2026 = vmatprep.subr.mxu0 0.0
    %2027 = vmatpush2.msra.mxu0 0.0
    %2028 = vmatprep.subr.mxu0 0.0
    %2029 = vmatpush2.msra.mxu0 0.0
    %2030 = vmatprep.subr.mxu0 0.0
    %2031 = vmatpush2.msra.mxu0 0.0
    %2032 = vmatprep.subr.mxu0 0.0
    %2033 = vmatpush2.msra.mxu0 0.0
    %2034 = vmatprep.subr.mxu0 0.0
    %2035 = vmatpush2.msra.mxu0 0.0
    %2036 = vmatprep.subr.mxu0 0.0
    %2037 = vmatpush2.msra.mxu0 0.0
    %2038 = vmatprep.subr.mxu0 0.0
    %2039 = vmatpush2.msra.mxu0 0.0
    %2040 = vmatprep.subr.mxu0 0.0
    %2041 = vmatpush2.msra.mxu0 0.0
    %2042 = vmatprep.subr.mxu0 0.0
    %2043 = vmatpush2.msra.mxu0 0.0
    %2044 = vmatprep.subr.mxu0 0.0
    %2045 = vmatpush2.msra.mxu0 0.0
    %2046 = vmatprep.subr.mxu0 0.0
    %2047 = vmatpush2.msra.mxu0 0.0
    %2048 = vmatprep.mubr.f32.mxu0 0.0
    %2049 = vmatmul.mubr.f32.gmra.mxu0 %v1979
    %v2050 = vpop.f32.mrf.mxu0
    %v2051 = vadd.f32 %v1977, %v2050
    %v2052 = vpop.f32.mrf.mxu0
    %2053 = vmatprep.mubr.f32.mxu0 0.0
    %2054 = vmatmul.mubr.f32.gmra.mxu0 %v1982
    %v2055 = vpop.f32.mrf.mxu0
    %v2056 = vadd.f32 %v1977, %v2055
    %v2057 = vpop.f32.mrf.mxu0
    %2058 = vdwg.mxu0
    %v2059 = vmul.f32 %v2051, 0.5
    %v2060 = vmul.f32 %v2056, 0.5
    %v2061 = vmul.f32 %v2051, 0.70710677
    %v2062 = vmul.f32 %v2056, 0.70710677
    %v2063 = verf.f32.pop %v2061
    %v2064 = verf.f32.pop %v2062
    %v2065 = vadd.f32 %v2063, 1.0
    %v2066 = vadd.f32 %v2064, 1.0
    %v2067 = vmul.f32 %v2059, %v2065
    %v2068 = vmul.f32 %v2060, %v2066
    %v2069 = vld [vmem:[#allocation6 + $0x2e0] sm:$0xff]
    %v2070 = vld [vmem:[#allocation6 + $0x2e8] sm:$0xff]
    %v2071 = vld [vmem:[#allocation6 + $0x2f0] sm:$0xff]
    %v2072 = vld [vmem:[#allocation6 + $0x2f8] sm:$0xff]
    %v2073 = vld [vmem:[#allocation6 + $0x300] sm:$0xff]
    %v2074 = vld [vmem:[#allocation6 + $0x308] sm:$0xff]
    %v2075 = vld [vmem:[#allocation6 + $0x310] sm:$0xff]
    %v2076 = vld [vmem:[#allocation6 + $0x318] sm:$0xff]
    %v2077 = vld [vmem:[#allocation6 + $0x320] sm:$0xff]
    %v2078 = vld [vmem:[#allocation6 + $0x328] sm:$0xff]
    %v2079 = vld [vmem:[#allocation6 + $0x330] sm:$0xff]
    %v2080 = vld [vmem:[#allocation6 + $0x338] sm:$0xff]
    %v2081 = vld [vmem:[#allocation6 + $0x340] sm:$0xff]
    %v2082 = vld [vmem:[#allocation6 + $0x348] sm:$0xff]
    %v2083 = vld [vmem:[#allocation6 + $0x350] sm:$0xff]
    %v2084 = vld [vmem:[#allocation6 + $0x358] sm:$0xff]
    %v2085 = vld [vmem:[#allocation6 + $0x36f] sm:$0x1]
    %v2086 = vlaneseq
    %v2087 = vshrl.u32 %v2086, 7
    %v2088 = vsub.s32 0, %v2087
    %v2089 = vrot.slane %v2085, %v2088
    %2090 = vmatprep.subr.mxu0 0.0
    %2091 = vmatpush1.msra.mxu0 %v2084
    %2092 = vmatprep.subr.mxu0 0.0
    %2093 = vmatpush1.msra.mxu0 %v2083
    %2094 = vmatprep.subr.mxu0 0.0
    %2095 = vmatpush1.msra.mxu0 %v2082
    %2096 = vmatprep.subr.mxu0 0.0
    %2097 = vmatpush1.msra.mxu0 %v2081
    %2098 = vmatprep.subr.mxu0 0.0
    %2099 = vmatpush1.msra.mxu0 %v2080
    %2100 = vmatprep.subr.mxu0 0.0
    %2101 = vmatpush1.msra.mxu0 %v2079
    %2102 = vmatprep.subr.mxu0 0.0
    %2103 = vmatpush1.msra.mxu0 %v2078
    %2104 = vmatprep.subr.mxu0 0.0
    %2105 = vmatpush1.msra.mxu0 %v2077
    %2106 = vmatprep.subr.mxu0 0.0
    %2107 = vmatpush1.msra.mxu0 %v2076
    %2108 = vmatprep.subr.mxu0 0.0
    %2109 = vmatpush1.msra.mxu0 %v2075
    %2110 = vmatprep.subr.mxu0 0.0
    %2111 = vmatpush1.msra.mxu0 %v2074
    %2112 = vmatprep.subr.mxu0 0.0
    %2113 = vmatpush1.msra.mxu0 %v2073
    %2114 = vmatprep.subr.mxu0 0.0
    %2115 = vmatpush1.msra.mxu0 %v2072
    %2116 = vmatprep.subr.mxu0 0.0
    %2117 = vmatpush1.msra.mxu0 %v2071
    %2118 = vmatprep.subr.mxu0 0.0
    %2119 = vmatpush1.msra.mxu0 %v2070
    %2120 = vmatprep.subr.mxu0 0.0
    %2121 = vmatpush1.msra.mxu0 %v2069
    %2122 = vmatprep.subr.mxu0 0.0
    %2123 = vmatpush2.msra.mxu0 0.0
    %2124 = vmatprep.subr.mxu0 0.0
    %2125 = vmatpush2.msra.mxu0 0.0
    %2126 = vmatprep.subr.mxu0 0.0
    %2127 = vmatpush2.msra.mxu0 0.0
    %2128 = vmatprep.subr.mxu0 0.0
    %2129 = vmatpush2.msra.mxu0 0.0
    %2130 = vmatprep.subr.mxu0 0.0
    %2131 = vmatpush2.msra.mxu0 0.0
    %2132 = vmatprep.subr.mxu0 0.0
    %2133 = vmatpush2.msra.mxu0 0.0
    %2134 = vmatprep.subr.mxu0 0.0
    %2135 = vmatpush2.msra.mxu0 0.0
    %2136 = vmatprep.subr.mxu0 0.0
    %2137 = vmatpush2.msra.mxu0 0.0
    %2138 = vmatprep.subr.mxu0 0.0
    %2139 = vmatpush2.msra.mxu0 0.0
    %2140 = vmatprep.subr.mxu0 0.0
    %2141 = vmatpush2.msra.mxu0 0.0
    %2142 = vmatprep.subr.mxu0 0.0
    %2143 = vmatpush2.msra.mxu0 0.0
    %2144 = vmatprep.subr.mxu0 0.0
    %2145 = vmatpush2.msra.mxu0 0.0
    %2146 = vmatprep.subr.mxu0 0.0
    %2147 = vmatpush2.msra.mxu0 0.0
    %2148 = vmatprep.subr.mxu0 0.0
    %2149 = vmatpush2.msra.mxu0 0.0
    %2150 = vmatprep.subr.mxu0 0.0
    %2151 = vmatpush2.msra.mxu0 0.0
    %2152 = vmatprep.subr.mxu0 0.0
    %2153 = vmatpush2.msra.mxu0 0.0
    %2154 = vmatprep.mubr.f32.mxu0 0.0
    %2155 = vmatmul.mubr.f32.gmra.mxu0 %v2067
    %v2156 = vpop.f32.mrf.mxu0
    %v2157 = vadd.f32 %v2089, %v2156
    %v2158 = vpop.f32.mrf.mxu0
    %2159 = vmatprep.mubr.f32.mxu0 0.0
    %2160 = vmatmul.mubr.f32.gmra.mxu0 %v2068
    %v2161 = vpop.f32.mrf.mxu0
    %v2162 = vadd.f32 %v2089, %v2161
    %v2163 = vpop.f32.mrf.mxu0
    %2164 = vdwg.mxu0
    %v2165 = vadd.f32 %v1967, %v2157
    %v2166 = vadd.f32 %v1968, %v2162
    %v2167 = vld [vmem:[#allocation6 + $0x370] sm:$0x1]
    %v2168 = vld [vmem:[#allocation6 + $0x371] sm:$0x1]
    %v2169 = vsel %vm94, %v2165, 0.0
    %2170 = vadd.xlane.f32.xlu0 %v2169
    %v2171 = vpop.xlane.xlu0 %2170
    %v2172 = vsel %vm94, %v2166, 0.0
    %2173 = vadd.xlane.f32.xlu0 %v2172
    %v2174 = vpop.xlane.xlu0 %2173
    %v2175 = vmul.f32 %v2171, %v891
    %v2176 = vmul.f32 %v2174, %v891
    %v2177 = vsub.f32 %v2165, %v2175
    %v2178 = vsub.f32 %v2166, %v2176
    %v2179 = vmul.f32 %v2177, %v2177
    %v2180 = vmul.f32 %v2178, %v2178
    %v2181 = vsel %vm94, %v2179, 0.0
    %2182 = vadd.xlane.f32.xlu0 %v2181
    %v2183 = vpop.xlane.xlu0 %2182
    %v2184 = vsel %vm94, %v2180, 0.0
    %2185 = vadd.xlane.f32.xlu0 %v2184
    %v2186 = vpop.xlane.xlu0 %2185
    %v2187 = vmul.f32 %v2183, %v891
    %v2188 = vmul.f32 %v2186, %v891
    %v2189 = vadd.f32 %v2187, 1e-05
    %v2190 = vadd.f32 %v2188, 1e-05
    %v2191 = vrsqrt.pop %v2189
    %v2192 = vrsqrt.pop %v2190
    %v2193 = vmul.f32 %v2177, %v2191
    %v2194 = vmul.f32 %v2178, %v2192
    %v2195 = vlaneseq
    %v2196 = vshrl.u32 %v2195, 7
    %v2197 = vsub.s32 0, %v2196
    %v2198 = vrot.slane %v2167, %v2197
    %v2199 = vmul.f32 %v2193, %v2198
    %v2200 = vmul.f32 %v2194, %v2198
    %v2201 = vlaneseq
    %v2202 = vshrl.u32 %v2201, 7
    %v2203 = vsub.s32 0, %v2202
    %v2204 = vrot.slane %v2168, %v2203
    %v2205 = vadd.f32 %v2199, %v2204
    %v2206 = vadd.f32 %v2200, %v2204
    %v2207 = vld [vmem:[#allocation6 + $0x372] sm:$0x1]
    %v2208 = vld [vmem:[#allocation6 + $0x373] sm:$0x1]
    %v2209 = vlaneseq
    %v2210 = vshrl.u32 %v2209, 7
    %v2211 = vsub.s32 0, %v2210
    %v2212 = vrot.slane %v2207, %v2211
    %v2213 = vmul.f32 %v2205, %v2212
    %v2214 = vmul.f32 %v2206, %v2212
    %v2215 = vsel %vm94, %v2213, 0.0
    %2216 = vadd.xlane.f32.xlu0 %v2215
    %v2217 = vpop.xlane.xlu0 %2216
    %v2218 = vsel %vm94, %v2214, 0.0
    %2219 = vadd.xlane.f32.xlu0 %v2218
    %v2220 = vpop.xlane.xlu0 %2219
    %v2221 = vlaneseq
    %v2222 = vshrl.u32 %v2221, 7
    %v2223 = vsub.s32 0, %v2222
    %v2224 = vrot.slane %v2208, %v2223
    %v2225 = vadd.f32 %v2217, %v2224
    %v2226 = vadd.f32 %v2220, %v2224
    %vm2227 = vcmask 7168
    %2228 = vst.msk [vmem:[%s2] sm:$0xff] %vm2227, %v2225
    %2229 = vst.msk [vmem:[%s2 + $0x8] sm:$0xff] %vm2227, %v2226
    // Predicated region
    $region18: #{forward.1} parent=1 // pred_check
      _
    $region19: #{forward.1} parent=1 // pred_check_branch
      %2231 = sbr.rel (0) target = $region21
    $region20: #{forward.1} parent=1 // pred_region
      _
    $region21: #{forward.1} parent=1 // pred_fallthru
      _
    // Predicated region
    $region22: #{forward.1} parent=1 // pred_check
      _
    $region23: #{forward.1} parent=1 // pred_check_branch
      %2233 = sbr.rel (0) target = $region25
    $region24: #{forward.1} parent=1 // pred_region
      _
    $region25: #{forward.1} parent=1 // pred_fallthru
      _
    %2234 = vsyncpa [#allocation5], 1
    %2235 = vsyncpa [#allocation7], 1

</llo_original>
